<compile_context>
chip_gen: v6e
topology: v6e:2x2x1
jax: 0.10.0
libtpu: 0.0.40
codegen_flags: <defaults>
</compile_context>

<pallas_src>
import jax
import jax.numpy as jnp
from jax.experimental import pallas as pl
from jax.experimental.pallas import tpu as pltpu

# ----------------------------------------------------------------------------
# Model hyper-parameters (synthetic, consistent with the module's __init__)
# ----------------------------------------------------------------------------
FEATURE_DIMS = {"audio": 16, "video": 24, "text": 12}   # feature_dim_dict
EMBED_DIM = 32                                           # embed_dim
N_FEATS = len(FEATURE_DIMS)
FUSED_DIM = EMBED_DIM * N_FEATS                          # 96
HIDDEN_DIM = 64                                          # hidden_dim
OUTPUT_DIM = 8                                           # output_dim
EPS = 1e-5

IN_DIM = sum(FEATURE_DIMS.values())                      # 52
IN_PAD = 56                                              # pad to sublane multiple
OUT_PAD = 128                                            # lane-dense output

# Row offsets inside the packed weight slab (all multiples of 8).
R_ENC = 0                    # rows [0, 56)   : block-diagonal encoder weight
R_W1 = R_ENC + IN_PAD        # rows [56, 152) : folded classifier w1 (96, 64)
R_W2 = R_W1 + FUSED_DIM      # rows [152, 216): w2 (64, 64)
R_W3 = R_W2 + HIDDEN_DIM     # rows [216, 280): w3 padded to (64, 128)
W_ROWS = R_W3 + HIDDEN_DIM   # 280
V_ROWS = 8                   # bias / gamma / beta rows, each padded to 128 lanes

BATCH = 256                  # example batch
TB = 128                     # rows per grid step


def _layernorm(x, gamma=None, beta=None):
    mu = jnp.mean(x, axis=-1, keepdims=True)
    var = jnp.mean(jnp.square(x - mu), axis=-1, keepdims=True)
    xn = (x - mu) * jax.lax.rsqrt(var + EPS)
    if gamma is not None:
        xn = xn * gamma + beta
    return xn


# ----------------------------------------------------------------------------
# Kernel: full forward pass for one batch tile
# ----------------------------------------------------------------------------
def fusion_kernel(x_ref, w_ref, v_ref, out_ref):
    x = x_ref[...]                                               # (TB, 56)

    # --- fused encoders: one block-diagonal matmul == 3 Linear + concat ---
    h = jnp.dot(x, w_ref[R_ENC:R_ENC + IN_PAD, :FUSED_DIM],
                preferred_element_type=jnp.float32) + v_ref[0:1, :FUSED_DIM]

    # --- fuser LayerNorm (its affine is folded into w1 / b1) ---
    h = _layernorm(h)

    # --- classifier layer 1: Linear -> LayerNorm -> ReLU (Dropout = id) ---
    z = jnp.dot(h, w_ref[R_W1:R_W1 + FUSED_DIM, :HIDDEN_DIM],
                preferred_element_type=jnp.float32) + v_ref[1:2, :HIDDEN_DIM]
    z = _layernorm(z, v_ref[2:3, :HIDDEN_DIM], v_ref[3:4, :HIDDEN_DIM])
    z = jnp.maximum(z, 0.0)

    # --- classifier layer 2: Linear -> LayerNorm -> ReLU (Dropout = id) ---
    z = jnp.dot(z, w_ref[R_W2:R_W2 + HIDDEN_DIM, :HIDDEN_DIM],
                preferred_element_type=jnp.float32) + v_ref[4:5, :HIDDEN_DIM]
    z = _layernorm(z, v_ref[5:6, :HIDDEN_DIM], v_ref[6:7, :HIDDEN_DIM])
    z = jnp.maximum(z, 0.0)

    # --- output layer (padded to 128 lanes -> unmasked lane-dense store) ---
    z = jnp.dot(z, w_ref[R_W3:R_W3 + HIDDEN_DIM, :],
                preferred_element_type=jnp.float32) + v_ref[7:8, :]
    out_ref[...] = jax.nn.sigmoid(z)


# ----------------------------------------------------------------------------
# Wrapper
# ----------------------------------------------------------------------------
@jax.jit
def network_forward(inputs, w_slab, v_slab):
    x_cat = jnp.concatenate(
        [inputs["audio"], inputs["video"], inputs["text"]], axis=-1)
    x_cat = jnp.pad(x_cat, ((0, 0), (0, IN_PAD - IN_DIM)))       # (B, 56)
    batch = x_cat.shape[0]

    out = pl.pallas_call(
        fusion_kernel,
        out_shape=jax.ShapeDtypeStruct((batch, OUT_PAD), jnp.float32),
        grid_spec=pltpu.PrefetchScalarGridSpec(
            num_scalar_prefetch=0,
            grid=(pl.cdiv(batch, TB),),
            in_specs=[
                pl.BlockSpec((TB, IN_PAD), lambda i: (i, 0)),
                pl.BlockSpec((W_ROWS, 128), lambda i: (0, 0)),   # resident
                pl.BlockSpec((V_ROWS, 128), lambda i: (0, 0)),   # resident
            ],
            out_specs=pl.BlockSpec((TB, OUT_PAD), lambda i: (i, 0)),
        ),
        compiler_params=pltpu.CompilerParams(
            dimension_semantics=("parallel",)),
    )(x_cat, w_slab, v_slab)
    return out[:, :OUTPUT_DIM]


# ----------------------------------------------------------------------------
# Parameter packing (one-time, wrapper-side)
# ----------------------------------------------------------------------------
def pack_params(p):
    da, dv, dt = FEATURE_DIMS["audio"], FEATURE_DIMS["video"], FEATURE_DIMS["text"]

    # Block-diagonal encoder weight: concat(inputs) @ W_enc == concat(encodings)
    w_enc = jnp.zeros((IN_PAD, FUSED_DIM), jnp.float32)
    w_enc = w_enc.at[0:da, 0:EMBED_DIM].set(p["w_enc_audio"])
    w_enc = w_enc.at[da:da + dv, EMBED_DIM:2 * EMBED_DIM].set(p["w_enc_video"])
    w_enc = w_enc.at[da + dv:da + dv + dt, 2 * EMBED_DIM:3 * EMBED_DIM].set(p["w_enc_text"])
    b_enc = jnp.concatenate(
        [p["b_enc_audio"], p["b_enc_video"], p["b_enc_text"]], axis=-1)  # (1, 96)

    # Fold the fuser LayerNorm affine into w1 / b1 (no nonlinearity between).
    w1f = p["g_fuse"].reshape(-1, 1) * p["w1"]                   # diag(g) @ w1
    b1f = p["b_fuse"] @ p["w1"] + p["b1"]                        # (1, 64)

    # Pad output projection to 128 lanes.
    w3p = jnp.zeros((HIDDEN_DIM, OUT_PAD), jnp.float32).at[:, :OUTPUT_DIM].set(p["w3"])
    b3p = jnp.zeros((1, OUT_PAD), jnp.float32).at[:, :OUTPUT_DIM].set(p["b3"])

    w_slab = jnp.zeros((W_ROWS, 128), jnp.float32)
    w_slab = w_slab.at[R_ENC:R_ENC + IN_PAD, :FUSED_DIM].set(w_enc)
    w_slab = w_slab.at[R_W1:R_W1 + FUSED_DIM, :HIDDEN_DIM].set(w1f)
    w_slab = w_slab.at[R_W2:R_W2 + HIDDEN_DIM, :HIDDEN_DIM].set(p["w2"])
    w_slab = w_slab.at[R_W3:R_W3 + HIDDEN_DIM, :].set(w3p)

    v_slab = jnp.zeros((V_ROWS, 128), jnp.float32)
    v_slab = v_slab.at[0, :FUSED_DIM].set(b_enc[0])
    v_slab = v_slab.at[1, :HIDDEN_DIM].set(b1f[0])
    v_slab = v_slab.at[2, :HIDDEN_DIM].set(p["g1"][0])
    v_slab = v_slab.at[3, :HIDDEN_DIM].set(p["be1"][0])
    v_slab = v_slab.at[4, :HIDDEN_DIM].set(p["b2"][0])
    v_slab = v_slab.at[5, :HIDDEN_DIM].set(p["g2"][0])
    v_slab = v_slab.at[6, :HIDDEN_DIM].set(p["be2"][0])
    v_slab = v_slab.at[7, :].set(b3p[0])
    return w_slab, v_slab


# ----------------------------------------------------------------------------
# Pure-JAX reference (mirrors the PyTorch module with unpacked params)
# ----------------------------------------------------------------------------
def reference_forward(inputs, p):
    ha = inputs["audio"] @ p["w_enc_audio"] + p["b_enc_audio"]
    hv = inputs["video"] @ p["w_enc_video"] + p["b_enc_video"]
    ht = inputs["text"] @ p["w_enc_text"] + p["b_enc_text"]
    fused = jnp.concatenate([ha, hv, ht], axis=-1)
    fused = _layernorm(fused, p["g_fuse"], p["b_fuse"])
    z = _layernorm(fused @ p["w1"] + p["b1"], p["g1"], p["be1"])
    z = jnp.maximum(z, 0.0)
    z = _layernorm(z @ p["w2"] + p["b2"], p["g2"], p["be2"])
    z = jnp.maximum(z, 0.0)
    z = z @ p["w3"] + p["b3"]
    return jax.nn.sigmoid(z)


# ----------------------------------------------------------------------------
# Deterministic parameter / input construction
# ----------------------------------------------------------------------------
def make_params(key):
    keys = jax.random.split(key, 20)

    def lin(kw, kb, fan_in, fan_out):
        w = jax.random.normal(kw, (fan_in, fan_out), jnp.float32) * (1.0 / fan_in) ** 0.5
        b = 0.1 * jax.random.normal(kb, (1, fan_out), jnp.float32)
        return w, b

    def ln(kg, kb, dim):
        g = 1.0 + 0.1 * jax.random.normal(kg, (1, dim), jnp.float32)
        b = 0.1 * jax.random.normal(kb, (1, dim), jnp.float32)
        return g, b

    p = {}
    p["w_enc_audio"], p["b_enc_audio"] = lin(keys[0], keys[1], FEATURE_DIMS["audio"], EMBED_DIM)
    p["w_enc_video"], p["b_enc_video"] = lin(keys[2], keys[3], FEATURE_DIMS["video"], EMBED_DIM)
    p["w_enc_text"], p["b_enc_text"] = lin(keys[4], keys[5], FEATURE_DIMS["text"], EMBED_DIM)
    p["g_fuse"], p["b_fuse"] = ln(keys[6], keys[7], FUSED_DIM)
    p["w1"], p["b1"] = lin(keys[8], keys[9], FUSED_DIM, HIDDEN_DIM)
    p["g1"], p["be1"] = ln(keys[10], keys[11], HIDDEN_DIM)
    p["w2"], p["b2"] = lin(keys[12], keys[13], HIDDEN_DIM, HIDDEN_DIM)
    p["g2"], p["be2"] = ln(keys[14], keys[15], HIDDEN_DIM)
    p["w3"], p["b3"] = lin(keys[16], keys[17], HIDDEN_DIM, OUTPUT_DIM)
    return p


if __name__ == "__main__":
    key = jax.random.PRNGKey(0)
    k_in, k_par = jax.random.split(key)
    k_a, k_v, k_t = jax.random.split(k_in, 3)

    inputs = {
        "audio": jax.random.normal(k_a, (BATCH, FEATURE_DIMS["audio"]), jnp.float32),
        "video": jax.random.normal(k_v, (BATCH, FEATURE_DIMS["video"]), jnp.float32),
        "text": jax.random.normal(k_t, (BATCH, FEATURE_DIMS["text"]), jnp.float32),
    }
    params = make_params(k_par)
    w_slab, v_slab = pack_params(params)

    out = network_forward(inputs, w_slab, v_slab)
    out = jax.block_until_ready(out)

    ref = reference_forward(inputs, params)
    assert out.shape == (BATCH, OUTPUT_DIM)
    assert jnp.allclose(out, ref, atol=1e-4, rtol=1e-4), "mismatch vs JAX reference"

    # TODO(synk): Dropout is treated as identity (inference / eval mode).
    print("KERNEL_OK")
</pallas_src>

<mosaic_0001>
module attributes {stable_mosaic.version = 11 : i64} {
  func.func @fusion_kernel(%arg0: i32, %arg1: memref<128x56xf32, #tpu.memory_space<vmem>>, %arg2: memref<280x128xf32, #tpu.memory_space<vmem>>, %arg3: memref<8x128xf32, #tpu.memory_space<vmem>>, %arg4: memref<128x128xf32, #tpu.memory_space<vmem>>) attributes {dimension_semantics = [#tpu.dimension_semantics<parallel>], iteration_bounds = array<i64: 2>, scalar_prefetch = 0 : i64, scratch_operands = 0 : i64, tpu.core_type = #tpu.core_type<tc>, window_params = [{transform_indices = @transform_0, window_bounds = array<i64: 128, 56>}, {pipeline_mode = #tpu.pipeline_mode<synchronous>, transform_indices = @transform_1, window_bounds = array<i64: 280, 128>}, {pipeline_mode = #tpu.pipeline_mode<synchronous>, transform_indices = @transform_2, window_bounds = array<i64: 8, 128>}, {transform_indices = @transform_3, window_bounds = array<i64: 128, 128>}]} {
    %c0 = arith.constant 0 : index
    %c0_0 = arith.constant 0 : index
    %0 = vector.load %arg1[%c0, %c0_0] : memref<128x56xf32, #tpu.memory_space<vmem>>, vector<128x56xf32>
    %c0_1 = arith.constant 0 : index
    %c0_2 = arith.constant 0 : index
    %1 = vector.load %arg2[%c0_1, %c0_2] : memref<280x128xf32, #tpu.memory_space<vmem>>, vector<56x96xf32>
    %cst = arith.constant dense<0.000000e+00> : vector<128x96xf32>
    %2 = tpu.matmul %0, %1, %cst {dimension_numbers = #tpu.dot_dimension_numbers<[1], [0], [0], [1], [0, 0, 1, 1], [], []>} : vector<128x56xf32>, vector<56x96xf32>, vector<128x96xf32> -> vector<128x96xf32>
    %c0_3 = arith.constant 0 : index
    %c0_4 = arith.constant 0 : index
    %3 = vector.load %arg3[%c0_3, %c0_4] : memref<8x128xf32, #tpu.memory_space<vmem>>, vector<1x96xf32>
    %4 = vector.broadcast %3 : vector<1x96xf32> to vector<128x96xf32>
    %5 = arith.addf %2, %4 : vector<128x96xf32>
    %cst_5 = arith.constant dense<0.000000e+00> : vector<128xf32>
    %6 = vector.multi_reduction <add>, %5, %cst_5 [1] : vector<128x96xf32> to vector<128xf32>
    %7 = vector.shape_cast %6 : vector<128xf32> to vector<128x1xf32>
    %cst_6 = arith.constant 9.600000e+01 : f32
    %8 = vector.broadcast %cst_6 : f32 to vector<128x1xf32>
    %9 = arith.divf %7, %8 : vector<128x1xf32>
    %10 = vector.broadcast %9 : vector<128x1xf32> to vector<128x96xf32>
    %11 = arith.subf %5, %10 : vector<128x96xf32>
    %12 = arith.mulf %11, %11 : vector<128x96xf32>
    %cst_7 = arith.constant dense<0.000000e+00> : vector<128xf32>
    %13 = vector.multi_reduction <add>, %12, %cst_7 [1] : vector<128x96xf32> to vector<128xf32>
    %14 = vector.shape_cast %13 : vector<128xf32> to vector<128x1xf32>
    %cst_8 = arith.constant 9.600000e+01 : f32
    %15 = vector.broadcast %cst_8 : f32 to vector<128x1xf32>
    %16 = arith.divf %14, %15 : vector<128x1xf32>
    %17 = vector.broadcast %9 : vector<128x1xf32> to vector<128x96xf32>
    %18 = arith.subf %5, %17 : vector<128x96xf32>
    %cst_9 = arith.constant 9.99999974E-6 : f32
    %19 = vector.broadcast %cst_9 : f32 to vector<128x1xf32>
    %20 = arith.addf %16, %19 : vector<128x1xf32>
    %21 = math.rsqrt %20 : vector<128x1xf32>
    %22 = vector.broadcast %21 : vector<128x1xf32> to vector<128x96xf32>
    %23 = arith.mulf %18, %22 : vector<128x96xf32>
    %c56 = arith.constant 56 : index
    %c0_10 = arith.constant 0 : index
    %24 = vector.load %arg2[%c56, %c0_10] : memref<280x128xf32, #tpu.memory_space<vmem>>, vector<96x64xf32>
    %cst_11 = arith.constant dense<0.000000e+00> : vector<128x64xf32>
    %25 = tpu.matmul %23, %24, %cst_11 {dimension_numbers = #tpu.dot_dimension_numbers<[1], [0], [0], [1], [0, 0, 1, 1], [], []>} : vector<128x96xf32>, vector<96x64xf32>, vector<128x64xf32> -> vector<128x64xf32>
    %c1 = arith.constant 1 : index
    %c0_12 = arith.constant 0 : index
    %26 = vector.load %arg3[%c1, %c0_12] : memref<8x128xf32, #tpu.memory_space<vmem>>, vector<1x64xf32>
    %27 = vector.broadcast %26 : vector<1x64xf32> to vector<128x64xf32>
    %28 = arith.addf %25, %27 : vector<128x64xf32>
    %c2 = arith.constant 2 : index
    %c0_13 = arith.constant 0 : index
    %29 = vector.load %arg3[%c2, %c0_13] : memref<8x128xf32, #tpu.memory_space<vmem>>, vector<1x64xf32>
    %c3 = arith.constant 3 : index
    %c0_14 = arith.constant 0 : index
    %30 = vector.load %arg3[%c3, %c0_14] : memref<8x128xf32, #tpu.memory_space<vmem>>, vector<1x64xf32>
    %cst_15 = arith.constant dense<0.000000e+00> : vector<128xf32>
    %31 = vector.multi_reduction <add>, %28, %cst_15 [1] : vector<128x64xf32> to vector<128xf32>
    %32 = vector.shape_cast %31 : vector<128xf32> to vector<128x1xf32>
    %cst_16 = arith.constant 6.400000e+01 : f32
    %33 = vector.broadcast %cst_16 : f32 to vector<128x1xf32>
    %34 = arith.divf %32, %33 : vector<128x1xf32>
    %35 = vector.broadcast %34 : vector<128x1xf32> to vector<128x64xf32>
    %36 = arith.subf %28, %35 : vector<128x64xf32>
    %37 = arith.mulf %36, %36 : vector<128x64xf32>
    %cst_17 = arith.constant dense<0.000000e+00> : vector<128xf32>
    %38 = vector.multi_reduction <add>, %37, %cst_17 [1] : vector<128x64xf32> to vector<128xf32>
    %39 = vector.shape_cast %38 : vector<128xf32> to vector<128x1xf32>
    %cst_18 = arith.constant 6.400000e+01 : f32
    %40 = vector.broadcast %cst_18 : f32 to vector<128x1xf32>
    %41 = arith.divf %39, %40 : vector<128x1xf32>
    %42 = vector.broadcast %34 : vector<128x1xf32> to vector<128x64xf32>
    %43 = arith.subf %28, %42 : vector<128x64xf32>
    %cst_19 = arith.constant 9.99999974E-6 : f32
    %44 = vector.broadcast %cst_19 : f32 to vector<128x1xf32>
    %45 = arith.addf %41, %44 : vector<128x1xf32>
    %46 = math.rsqrt %45 : vector<128x1xf32>
    %47 = vector.broadcast %46 : vector<128x1xf32> to vector<128x64xf32>
    %48 = arith.mulf %43, %47 : vector<128x64xf32>
    %49 = vector.broadcast %29 : vector<1x64xf32> to vector<128x64xf32>
    %50 = arith.mulf %48, %49 : vector<128x64xf32>
    %51 = vector.broadcast %30 : vector<1x64xf32> to vector<128x64xf32>
    %52 = arith.addf %50, %51 : vector<128x64xf32>
    %cst_20 = arith.constant 0.000000e+00 : f32
    %53 = vector.broadcast %cst_20 : f32 to vector<128x64xf32>
    %54 = arith.maximumf %52, %53 : vector<128x64xf32>
    %c152 = arith.constant 152 : index
    %c0_21 = arith.constant 0 : index
    %55 = vector.load %arg2[%c152, %c0_21] : memref<280x128xf32, #tpu.memory_space<vmem>>, vector<64x64xf32>
    %cst_22 = arith.constant dense<0.000000e+00> : vector<128x64xf32>
    %56 = tpu.matmul %54, %55, %cst_22 {dimension_numbers = #tpu.dot_dimension_numbers<[1], [0], [0], [1], [0, 0, 1, 1], [], []>} : vector<128x64xf32>, vector<64x64xf32>, vector<128x64xf32> -> vector<128x64xf32>
    %c4 = arith.constant 4 : index
    %c0_23 = arith.constant 0 : index
    %57 = vector.load %arg3[%c4, %c0_23] : memref<8x128xf32, #tpu.memory_space<vmem>>, vector<1x64xf32>
    %58 = vector.broadcast %57 : vector<1x64xf32> to vector<128x64xf32>
    %59 = arith.addf %56, %58 : vector<128x64xf32>
    %c5 = arith.constant 5 : index
    %c0_24 = arith.constant 0 : index
    %60 = vector.load %arg3[%c5, %c0_24] : memref<8x128xf32, #tpu.memory_space<vmem>>, vector<1x64xf32>
    %c6 = arith.constant 6 : index
    %c0_25 = arith.constant 0 : index
    %61 = vector.load %arg3[%c6, %c0_25] : memref<8x128xf32, #tpu.memory_space<vmem>>, vector<1x64xf32>
    %cst_26 = arith.constant dense<0.000000e+00> : vector<128xf32>
    %62 = vector.multi_reduction <add>, %59, %cst_26 [1] : vector<128x64xf32> to vector<128xf32>
    %63 = vector.shape_cast %62 : vector<128xf32> to vector<128x1xf32>
    %cst_27 = arith.constant 6.400000e+01 : f32
    %64 = vector.broadcast %cst_27 : f32 to vector<128x1xf32>
    %65 = arith.divf %63, %64 : vector<128x1xf32>
    %66 = vector.broadcast %65 : vector<128x1xf32> to vector<128x64xf32>
    %67 = arith.subf %59, %66 : vector<128x64xf32>
    %68 = arith.mulf %67, %67 : vector<128x64xf32>
    %cst_28 = arith.constant dense<0.000000e+00> : vector<128xf32>
    %69 = vector.multi_reduction <add>, %68, %cst_28 [1] : vector<128x64xf32> to vector<128xf32>
    %70 = vector.shape_cast %69 : vector<128xf32> to vector<128x1xf32>
    %cst_29 = arith.constant 6.400000e+01 : f32
    %71 = vector.broadcast %cst_29 : f32 to vector<128x1xf32>
    %72 = arith.divf %70, %71 : vector<128x1xf32>
    %73 = vector.broadcast %65 : vector<128x1xf32> to vector<128x64xf32>
    %74 = arith.subf %59, %73 : vector<128x64xf32>
    %cst_30 = arith.constant 9.99999974E-6 : f32
    %75 = vector.broadcast %cst_30 : f32 to vector<128x1xf32>
    %76 = arith.addf %72, %75 : vector<128x1xf32>
    %77 = math.rsqrt %76 : vector<128x1xf32>
    %78 = vector.broadcast %77 : vector<128x1xf32> to vector<128x64xf32>
    %79 = arith.mulf %74, %78 : vector<128x64xf32>
    %80 = vector.broadcast %60 : vector<1x64xf32> to vector<128x64xf32>
    %81 = arith.mulf %79, %80 : vector<128x64xf32>
    %82 = vector.broadcast %61 : vector<1x64xf32> to vector<128x64xf32>
    %83 = arith.addf %81, %82 : vector<128x64xf32>
    %cst_31 = arith.constant 0.000000e+00 : f32
    %84 = vector.broadcast %cst_31 : f32 to vector<128x64xf32>
    %85 = arith.maximumf %83, %84 : vector<128x64xf32>
    %c216 = arith.constant 216 : index
    %c0_32 = arith.constant 0 : index
    %86 = vector.load %arg2[%c216, %c0_32] : memref<280x128xf32, #tpu.memory_space<vmem>>, vector<64x128xf32>
    %cst_33 = arith.constant dense<0.000000e+00> : vector<128x128xf32>
    %87 = tpu.matmul %85, %86, %cst_33 {dimension_numbers = #tpu.dot_dimension_numbers<[1], [0], [0], [1], [0, 0, 1, 1], [], []>} : vector<128x64xf32>, vector<64x128xf32>, vector<128x128xf32> -> vector<128x128xf32>
    %c7 = arith.constant 7 : index
    %c0_34 = arith.constant 0 : index
    %88 = vector.load %arg3[%c7, %c0_34] : memref<8x128xf32, #tpu.memory_space<vmem>>, vector<1x128xf32>
    %89 = vector.broadcast %88 : vector<1x128xf32> to vector<128x128xf32>
    %90 = arith.addf %87, %89 : vector<128x128xf32>
    %91 = arith.negf %90 : vector<128x128xf32>
    %92 = math.exp %91 : vector<128x128xf32>
    %cst_35 = arith.constant 1.000000e+00 : f32
    %93 = vector.broadcast %cst_35 : f32 to vector<128x128xf32>
    %94 = arith.addf %93, %92 : vector<128x128xf32>
    %95 = arith.divf %93, %94 : vector<128x128xf32>
    %c0_36 = arith.constant 0 : index
    %c0_37 = arith.constant 0 : index
    %96 = vector.load %arg4[%c0_36, %c0_37] : memref<128x128xf32, #tpu.memory_space<vmem>>, vector<128x128xf32>
    tpu.vector_store %arg4[%c0_36, %c0_37], %95 {strides = array<i32>} : memref<128x128xf32, #tpu.memory_space<vmem>>, vector<128x128xf32>,
    return
  }
  func.func @transform_0(%arg0: i32) -> (i32, i32) {
    %c0_i32 = arith.constant 0 : i32
    %c0_i32_0 = arith.constant 0 : i32
    return %arg0, %c0_i32 : i32, i32
  }
  func.func @transform_1(%arg0: i32) -> (i32, i32) {
    %c0_i32 = arith.constant 0 : i32
    %c0_i32_0 = arith.constant 0 : i32
    %c0_i32_1 = arith.constant 0 : i32
    return %c0_i32, %c0_i32_0 : i32, i32
  }
  func.func @transform_2(%arg0: i32) -> (i32, i32) {
    %c0_i32 = arith.constant 0 : i32
    %c0_i32_0 = arith.constant 0 : i32
    %c0_i32_1 = arith.constant 0 : i32
    return %c0_i32, %c0_i32_0 : i32, i32
  }
  func.func @transform_3(%arg0: i32) -> (i32, i32) {
    %c0_i32 = arith.constant 0 : i32
    %c0_i32_0 = arith.constant 0 : i32
    return %arg0, %c0_i32 : i32, i32
  }
}

</mosaic_0001>

<llo_original>
// kernel: network_forward.1
$region0: #{network_forward.1}
  #allocation0 [shape = 'u32[]', space=smem, size = 0x4, offset = 0x4, fixed_abs, tag = 'smem constant byte address 0x4 - core index']
  #allocation1 [shape = 'u32[144,128]{1,0:T(1,128)}', space=vmem, size = 0x12000, scoped, tag = 'internal scratch']
  %s0 = inlined_call_operand.vmem [shape: f32[256,56], index: 0, kind: input, shape index: {}]
  %s1 = inlined_call_operand.vmem [shape: f32[280,128], index: 1, kind: input, shape index: {}]
  %s2 = inlined_call_operand.vmem [shape: f32[8,128], index: 2, kind: input, shape index: {}]
  %s3 = inlined_call_operand.vmem [shape: f32[256,128], index: 3, kind: output, shape index: {}]
  %s4 = sld [smem:[#allocation0]]
  $region45: #{network_forward.1} parent=0
    _
  %s6 = ssub.s32 1, %s4
  %s7 = scalar_select 0, %s6, %s4
  loop: start=0, step=1, limit=4
  $region2: #{network_forward.1} parent=0 // loop_pre_header
    _
  $region3: #{network_forward.1} parent=0 // loop_header
    %s9 = sphi 0, %s13
    %p10 = scmp.ge.s32.totalorder %s9, 4
    %s19 = sphi 0, %s21
    %s22 = sphi 0, %s19
    %s23 = sphi 0, %s22
    %s39 = sphi 0, %s23
    %s43 = sphi 0, %s43
    %s45 = sphi 0, %s43
    %s46 = sphi 0, %s45
    %s60 = sphi 0, %s46
    %s64 = sphi 0, %s64
    %s66 = sphi 0, %s64
    %s67 = sphi 0, %s66
    %s81 = sphi 0, %s67
    %s87 = sphi 0, %s89
    %s90 = sphi 0, %s87
    %s91 = sphi 0, %s90
    %s107 = sphi 0, %s91
  $region4: #{network_forward.1} parent=0 // loop_header_branch
    %12 = sbr.rel (%p10) target = $region8
  $region5: #{network_forward.1} parent=0 // loop_body
    %s14 = ssub.s32 %s9, 1
    %s15 = ssub.s32 %s9, 2
    %s16 = sadd.s32 %s9, 1
    %s17 = ssub.s32 %s9, %s16
    %p18 = scmp.eq.s32.totalorder %s17, 0
    %s20 = sadd.s32 %s19, 1
    %s21 = scalar_select %p18, %s19, %s20
    %p24 = pneg %p18
    %p25 = scmp.eq.s32.totalorder %s9, 1
    %p26 = por %p24, %p25
    %p27 = scmp.ne.s32.totalorder %s19, %s22
    %p28 = scmp.eq.s32.totalorder %s9, 0
    %p29 = por %p27, %p28
    %p30 = scmp.ne.s32.totalorder %s19, %s22
    %p31 = scmp.eq.s32.totalorder %s14, 1
    %p32 = por %p30, %p31
    %p33 = scmp.ne.s32.totalorder %s22, %s23
    %p34 = scmp.eq.s32.totalorder %s14, 0
    %p35 = por %p33, %p34
    %p36 = scmp.ne.s32.totalorder %s22, %s23
    %p37 = scmp.eq.s32.totalorder %s15, 1
    %p38 = por %p36, %p37
    %p40 = scmp.ne.s32.totalorder %s23, %s39
    %p41 = scmp.eq.s32.totalorder %s15, 0
    %p42 = por %p40, %p41
    %s44 = sadd.s32 %s43, 1
    %p47 = scmp.eq.s32.totalorder %s9, 1
    %p48 = scmp.ne.s32.totalorder %s43, %s45
    %p49 = scmp.eq.s32.totalorder %s9, 0
    %p50 = por %p48, %p49
    %p51 = scmp.ne.s32.totalorder %s43, %s45
    %p52 = scmp.eq.s32.totalorder %s14, 1
    %p53 = por %p51, %p52
    %p54 = scmp.ne.s32.totalorder %s45, %s46
    %p55 = scmp.eq.s32.totalorder %s14, 0
    %p56 = por %p54, %p55
    %p57 = scmp.ne.s32.totalorder %s45, %s46
    %p58 = scmp.eq.s32.totalorder %s15, 1
    %p59 = por %p57, %p58
    %p61 = scmp.ne.s32.totalorder %s46, %s60
    %p62 = scmp.eq.s32.totalorder %s15, 0
    %p63 = por %p61, %p62
    %s65 = sadd.s32 %s64, 1
    %p68 = scmp.eq.s32.totalorder %s9, 1
    %p69 = scmp.ne.s32.totalorder %s64, %s66
    %p70 = scmp.eq.s32.totalorder %s9, 0
    %p71 = por %p69, %p70
    %p72 = scmp.ne.s32.totalorder %s64, %s66
    %p73 = scmp.eq.s32.totalorder %s14, 1
    %p74 = por %p72, %p73
    %p75 = scmp.ne.s32.totalorder %s66, %s67
    %p76 = scmp.eq.s32.totalorder %s14, 0
    %p77 = por %p75, %p76
    %p78 = scmp.ne.s32.totalorder %s66, %s67
    %p79 = scmp.eq.s32.totalorder %s15, 1
    %p80 = por %p78, %p79
    %p82 = scmp.ne.s32.totalorder %s67, %s81
    %p83 = scmp.eq.s32.totalorder %s15, 0
    %p84 = por %p82, %p83
    %s85 = ssub.s32 %s9, %s16
    %p86 = scmp.eq.s32.totalorder %s85, 0
    %s88 = sadd.s32 %s87, 1
    %s89 = scalar_select %p86, %s87, %s88
    %p92 = pneg %p86
    %p93 = scmp.eq.s32.totalorder %s9, 1
    %p94 = por %p92, %p93
    %p95 = scmp.ne.s32.totalorder %s87, %s90
    %p96 = scmp.eq.s32.totalorder %s9, 0
    %p97 = por %p95, %p96
    %p98 = scmp.ne.s32.totalorder %s87, %s90
    %p99 = scmp.eq.s32.totalorder %s14, 1
    %p100 = por %p98, %p99
    %p101 = scmp.ne.s32.totalorder %s90, %s91
    %p102 = scmp.eq.s32.totalorder %s14, 0
    %p103 = por %p101, %p102
    %p104 = scmp.ne.s32.totalorder %s90, %s91
    %p105 = scmp.eq.s32.totalorder %s15, 1
    %p106 = por %p104, %p105
    %p108 = scmp.ne.s32.totalorder %s91, %s107
    %p109 = scmp.eq.s32.totalorder %s15, 0
    %p110 = por %p108, %p109
    %p111 = scmp.le.s32.totalorder 1, %s9
    %p112 = scmp.lt.s32.totalorder %s9, 3
    %p113 = pnand %p111, %p112
    %p114 = pneg %p113
    // Predicated region
    $region9: #{network_forward.1} parent=5 // pred_check
      _
    $region10: #{network_forward.1} parent=5 // pred_check_branch
      %116 = sbr.rel (%p113) target = $region12
    $region11: #{network_forward.1} parent=5 // pred_region
      %s117 = ssub.s32 %s9, 1
      // Predicated region
      $region13: #{network_forward.1} parent=11 // pred_check
        %p118 = pneg %p56
      $region14: #{network_forward.1} parent=11 // pred_check_branch
        %120 = sbr.rel (%p118) target = $region16
      $region15: #{network_forward.1} parent=11 // pred_region
        _
      $region16: #{network_forward.1} parent=11 // pred_fallthru
        _
      // Predicated region
      $region17: #{network_forward.1} parent=11 // pred_check
        %p121 = pneg %p77
      $region18: #{network_forward.1} parent=11 // pred_check_branch
        %123 = sbr.rel (%p121) target = $region20
      $region19: #{network_forward.1} parent=11 // pred_region
        _
      $region20: #{network_forward.1} parent=11 // pred_fallthru
        _
    $region12: #{network_forward.1} parent=5 // pred_fallthru
      _
    %p124 = scmp.lt.s32.totalorder %s9, 2
    // Predicated region
    $region21: #{network_forward.1} parent=5 // pred_check
      %p125 = pneg %p124
    $region22: #{network_forward.1} parent=5 // pred_check_branch
      %127 = sbr.rel (%p125) target = $region24
    $region23: #{network_forward.1} parent=5 // pred_region
      // Predicated region
      $region25: #{network_forward.1} parent=23 // pred_check
        %p128 = pneg %p29
      $region26: #{network_forward.1} parent=23 // pred_check_branch
        %130 = sbr.rel (%p128) target = $region28
      $region27: #{network_forward.1} parent=23 // pred_region
        %s131 = smul.u32 16, %s9
        %p132 = scmp.lt.s32.totalorder %s131, 31
        %s133 = scalar_select %p132, %s131, 31
        %s134 = smul.addr %s133, 8
        %s135 = scalar_lea.vmem %s0, %s134
        %s136 = smul.u32 16, %s9
      $region28: #{network_forward.1} parent=23 // pred_fallthru
        _
    $region24: #{network_forward.1} parent=5 // pred_fallthru
      _
    %p137 = scmp.le.s32.totalorder 1, %s9
    %p138 = scmp.lt.s32.totalorder %s9, 3
    %p139 = pnand %p137, %p138
    %p140 = pneg %p139
    // Predicated region
    $region29: #{network_forward.1} parent=5 // pred_check
      _
    $region30: #{network_forward.1} parent=5 // pred_check_branch
      %142 = sbr.rel (%p139) target = $region32
    $region31: #{network_forward.1} parent=5 // pred_region
      %s143 = ssub.s32 %s9, 1
      %s144 = smul.u32 16, %s14
      %p145 = scmp.lt.s32.totalorder %s144, 31
      %s146 = scalar_select %p145, %s144, 31
      %s147 = smul.addr %s146, 8
      %s148 = scalar_lea.vmem %s0, %s147
      %p149 = pneg %p35
      %p150 = pneg %p32
      %p151 = pneg %p56
      %p152 = pneg %p53
      %p153 = pneg %p77
      %p154 = pneg %p74
      %p155 = pneg %p103
      %p156 = pneg %p100
      %s157 = smul.u32 16, %s14
      %p158 = scmp.lt.s32.totalorder %s157, 31
      %s159 = scalar_select %p158, %s157, 31
      %s160 = smul.addr %s159, 8
      %s161 = scalar_lea.vmem %s3, %s160
      %s162 = smul.u32 16, %s14
      %p163 = scmp.lt.s32.totalorder %s162, 31
      %s164 = scalar_select %p163, %s162, 31
      %s165 = smul.addr %s164, 8
      %s166 = scalar_lea.vmem %s0, %s165
      %s167 = smul.u32 16, %s14
      %s168 = smul.u32 16, %s14
      %p169 = scmp.lt.s32.totalorder %s168, 31
      %s170 = scalar_select %p169, %s168, 31
      %s171 = smul.addr %s170, 8
      %s172 = scalar_lea.vmem %s3, %s171
      %s173 = smul.u32 16, %s14
      %v174 = vld [vmem:[%s166] sm:$0xff]
      %v175 = vld [vmem:[%s166 + $0x8] sm:$0xff]
      %v176 = vld [vmem:[%s166 + $0x10] sm:$0xff]
      %v177 = vld [vmem:[%s166 + $0x18] sm:$0xff]
      %v178 = vld [vmem:[%s166 + $0x20] sm:$0xff]
      %v179 = vld [vmem:[%s166 + $0x28] sm:$0xff]
      %v180 = vld [vmem:[%s166 + $0x30] sm:$0xff]
      %v181 = vld [vmem:[%s166 + $0x38] sm:$0xff]
      %v182 = vld [vmem:[%s166 + $0x40] sm:$0xff]
      %v183 = vld [vmem:[%s166 + $0x48] sm:$0xff]
      %v184 = vld [vmem:[%s166 + $0x50] sm:$0xff]
      %v185 = vld [vmem:[%s166 + $0x58] sm:$0xff]
      %v186 = vld [vmem:[%s166 + $0x60] sm:$0xff]
      %v187 = vld [vmem:[%s166 + $0x68] sm:$0xff]
      %v188 = vld [vmem:[%s166 + $0x70] sm:$0xff]
      %v189 = vld [vmem:[%s166 + $0x78] sm:$0xff]
      %v190 = vld [vmem:[%s1] sm:$0xff]
      %v191 = vld [vmem:[%s1 + $0x8] sm:$0xff]
      %v192 = vld [vmem:[%s1 + $0x10] sm:$0xff]
      %v193 = vld [vmem:[%s1 + $0x18] sm:$0xff]
      %v194 = vld [vmem:[%s1 + $0x20] sm:$0xff]
      %v195 = vld [vmem:[%s1 + $0x28] sm:$0xff]
      %v196 = vld [vmem:[%s1 + $0x30] sm:$0xff]
      %v197 = vld [vmem:[%s2] sm:$0x1]
      %v198 = vlaneseq
      %v199 = vshrl.u32 %v198, 7
      %v200 = vsub.s32 0, %v199
      %v201 = vrot.slane %v197, %v200
      %vm202 = vcmask 457728
      %v204 = vsel %vm202, %v174, 0
      %v207 = vsel %vm202, %v175, 0
      %v210 = vsel %vm202, %v176, 0
      %v213 = vsel %vm202, %v177, 0
      %v216 = vsel %vm202, %v178, 0
      %v219 = vsel %vm202, %v179, 0
      %v222 = vsel %vm202, %v180, 0
      %v225 = vsel %vm202, %v181, 0
      %v228 = vsel %vm202, %v182, 0
      %v231 = vsel %vm202, %v183, 0
      %v234 = vsel %vm202, %v184, 0
      %v237 = vsel %vm202, %v185, 0
      %v240 = vsel %vm202, %v186, 0
      %v243 = vsel %vm202, %v187, 0
      %v246 = vsel %vm202, %v188, 0
      %v249 = vsel %vm202, %v189, 0
      %251 = vmatprep.subr.mxu0 0.0
      %252 = vmatpush1.msra.mxu0 0.0
      %253 = vmatprep.subr.mxu0 0.0
      %254 = vmatpush1.msra.mxu0 0.0
      %255 = vmatprep.subr.mxu0 0.0
      %256 = vmatpush1.msra.mxu0 0.0
      %257 = vmatprep.subr.mxu0 0.0
      %258 = vmatpush1.msra.mxu0 0.0
      %259 = vmatprep.subr.mxu0 0.0
      %260 = vmatpush1.msra.mxu0 0.0
      %261 = vmatprep.subr.mxu0 0.0
      %262 = vmatpush1.msra.mxu0 0.0
      %263 = vmatprep.subr.mxu0 0.0
      %264 = vmatpush1.msra.mxu0 0.0
      %265 = vmatprep.subr.mxu0 0.0
      %266 = vmatpush1.msra.mxu0 0.0
      %267 = vmatprep.subr.mxu0 0.0
      %268 = vmatpush1.msra.mxu0 0.0
      %269 = vmatprep.subr.mxu0 0.0
      %270 = vmatpush1.msra.mxu0 %v196
      %271 = vmatprep.subr.mxu0 0.0
      %272 = vmatpush1.msra.mxu0 %v195
      %273 = vmatprep.subr.mxu0 0.0
      %274 = vmatpush1.msra.mxu0 %v194
      %275 = vmatprep.subr.mxu0 0.0
      %276 = vmatpush1.msra.mxu0 %v193
      %277 = vmatprep.subr.mxu0 0.0
      %278 = vmatpush1.msra.mxu0 %v192
      %279 = vmatprep.subr.mxu0 0.0
      %280 = vmatpush1.msra.mxu0 %v191
      %281 = vmatprep.subr.mxu0 0.0
      %282 = vmatpush1.msra.mxu0 %v190
      %283 = vmatprep.subr.mxu0 0.0
      %284 = vmatpush2.msra.mxu0 0.0
      %285 = vmatprep.subr.mxu0 0.0
      %286 = vmatpush2.msra.mxu0 0.0
      %287 = vmatprep.subr.mxu0 0.0
      %288 = vmatpush2.msra.mxu0 0.0
      %289 = vmatprep.subr.mxu0 0.0
      %290 = vmatpush2.msra.mxu0 0.0
      %291 = vmatprep.subr.mxu0 0.0
      %292 = vmatpush2.msra.mxu0 0.0
      %293 = vmatprep.subr.mxu0 0.0
      %294 = vmatpush2.msra.mxu0 0.0
      %295 = vmatprep.subr.mxu0 0.0
      %296 = vmatpush2.msra.mxu0 0.0
      %297 = vmatprep.subr.mxu0 0.0
      %298 = vmatpush2.msra.mxu0 0.0
      %299 = vmatprep.subr.mxu0 0.0
      %300 = vmatpush2.msra.mxu0 0.0
      %301 = vmatprep.subr.mxu0 0.0
      %302 = vmatpush2.msra.mxu0 0.0
      %303 = vmatprep.subr.mxu0 0.0
      %304 = vmatpush2.msra.mxu0 0.0
      %305 = vmatprep.subr.mxu0 0.0
      %306 = vmatpush2.msra.mxu0 0.0
      %307 = vmatprep.subr.mxu0 0.0
      %308 = vmatpush2.msra.mxu0 0.0
      %309 = vmatprep.subr.mxu0 0.0
      %310 = vmatpush2.msra.mxu0 0.0
      %311 = vmatprep.subr.mxu0 0.0
      %312 = vmatpush2.msra.mxu0 0.0
      %313 = vmatprep.subr.mxu0 0.0
      %314 = vmatpush2.msra.mxu0 0.0
      %315 = vmatprep.mubr.f32.mxu0 0.0
      %316 = vmatmul.mubr.f32.gmra.mxu0 %v204
      %v317 = vpop.f32.mrf.mxu0
      %v318 = vadd.f32 %v201, %v317
      %v319 = vpop.f32.mrf.mxu0
      %320 = vmatprep.mubr.f32.mxu0 0.0
      %321 = vmatmul.mubr.f32.gmra.mxu0 %v207
      %v322 = vpop.f32.mrf.mxu0
      %v323 = vadd.f32 %v201, %v322
      %v324 = vpop.f32.mrf.mxu0
      %325 = vmatprep.mubr.f32.mxu0 0.0
      %326 = vmatmul.mubr.f32.gmra.mxu0 %v210
      %v327 = vpop.f32.mrf.mxu0
      %v328 = vadd.f32 %v201, %v327
      %v329 = vpop.f32.mrf.mxu0
      %330 = vmatprep.mubr.f32.mxu0 0.0
      %331 = vmatmul.mubr.f32.gmra.mxu0 %v213
      %v332 = vpop.f32.mrf.mxu0
      %v333 = vadd.f32 %v201, %v332
      %v334 = vpop.f32.mrf.mxu0
      %335 = vmatprep.mubr.f32.mxu0 0.0
      %336 = vmatmul.mubr.f32.gmra.mxu0 %v216
      %v337 = vpop.f32.mrf.mxu0
      %v338 = vadd.f32 %v201, %v337
      %v339 = vpop.f32.mrf.mxu0
      %340 = vmatprep.mubr.f32.mxu0 0.0
      %341 = vmatmul.mubr.f32.gmra.mxu0 %v219
      %v342 = vpop.f32.mrf.mxu0
      %v343 = vadd.f32 %v201, %v342
      %v344 = vpop.f32.mrf.mxu0
      %345 = vmatprep.mubr.f32.mxu0 0.0
      %346 = vmatmul.mubr.f32.gmra.mxu0 %v222
      %v347 = vpop.f32.mrf.mxu0
      %v348 = vadd.f32 %v201, %v347
      %v349 = vpop.f32.mrf.mxu0
      %350 = vmatprep.mubr.f32.mxu0 0.0
      %351 = vmatmul.mubr.f32.gmra.mxu0 %v225
      %v352 = vpop.f32.mrf.mxu0
      %v353 = vadd.f32 %v201, %v352
      %v354 = vpop.f32.mrf.mxu0
      %355 = vmatprep.mubr.f32.mxu0 0.0
      %356 = vmatmul.mubr.f32.gmra.mxu0 %v228
      %v357 = vpop.f32.mrf.mxu0
      %v358 = vadd.f32 %v201, %v357
      %v359 = vpop.f32.mrf.mxu0
      %360 = vmatprep.mubr.f32.mxu0 0.0
      %361 = vmatmul.mubr.f32.gmra.mxu0 %v231
      %v362 = vpop.f32.mrf.mxu0
      %v363 = vadd.f32 %v201, %v362
      %v364 = vpop.f32.mrf.mxu0
      %365 = vmatprep.mubr.f32.mxu0 0.0
      %366 = vmatmul.mubr.f32.gmra.mxu0 %v234
      %v367 = vpop.f32.mrf.mxu0
      %v368 = vadd.f32 %v201, %v367
      %v369 = vpop.f32.mrf.mxu0
      %370 = vmatprep.mubr.f32.mxu0 0.0
      %371 = vmatmul.mubr.f32.gmra.mxu0 %v237
      %v372 = vpop.f32.mrf.mxu0
      %v373 = vadd.f32 %v201, %v372
      %v374 = vpop.f32.mrf.mxu0
      %375 = vmatprep.mubr.f32.mxu0 0.0
      %376 = vmatmul.mubr.f32.gmra.mxu0 %v240
      %v377 = vpop.f32.mrf.mxu0
      %v378 = vadd.f32 %v201, %v377
      %v379 = vpop.f32.mrf.mxu0
      %380 = vmatprep.mubr.f32.mxu0 0.0
      %381 = vmatmul.mubr.f32.gmra.mxu0 %v243
      %v382 = vpop.f32.mrf.mxu0
      %v383 = vadd.f32 %v201, %v382
      %v384 = vpop.f32.mrf.mxu0
      %385 = vmatprep.mubr.f32.mxu0 0.0
      %386 = vmatmul.mubr.f32.gmra.mxu0 %v246
      %v387 = vpop.f32.mrf.mxu0
      %v388 = vadd.f32 %v201, %v387
      %v389 = vpop.f32.mrf.mxu0
      %390 = vmatprep.mubr.f32.mxu0 0.0
      %391 = vmatmul.mubr.f32.gmra.mxu0 %v249
      %v392 = vpop.f32.mrf.mxu0
      %v393 = vadd.f32 %v201, %v392
      %v394 = vpop.f32.mrf.mxu0
      %395 = vdwg.mxu0
      %vm396 = vcmask 785408
      %v397 = vsel %vm396, %v318, 0.0
      %398 = vadd.xlane.f32.xlu0 %v397
      %v399 = vpop.xlane.xlu0 %398
      %v400 = vsel %vm396, %v323, 0.0
      %401 = vadd.xlane.f32.xlu0 %v400
      %v402 = vpop.xlane.xlu0 %401
      %v403 = vsel %vm396, %v328, 0.0
      %404 = vadd.xlane.f32.xlu0 %v403
      %v405 = vpop.xlane.xlu0 %404
      %v406 = vsel %vm396, %v333, 0.0
      %407 = vadd.xlane.f32.xlu0 %v406
      %v408 = vpop.xlane.xlu0 %407
      %v409 = vsel %vm396, %v338, 0.0
      %410 = vadd.xlane.f32.xlu0 %v409
      %v411 = vpop.xlane.xlu0 %410
      %v412 = vsel %vm396, %v343, 0.0
      %413 = vadd.xlane.f32.xlu0 %v412
      %v414 = vpop.xlane.xlu0 %413
      %v415 = vsel %vm396, %v348, 0.0
      %416 = vadd.xlane.f32.xlu0 %v415
      %v417 = vpop.xlane.xlu0 %416
      %v418 = vsel %vm396, %v353, 0.0
      %419 = vadd.xlane.f32.xlu0 %v418
      %v420 = vpop.xlane.xlu0 %419
      %v421 = vsel %vm396, %v358, 0.0
      %422 = vadd.xlane.f32.xlu0 %v421
      %v423 = vpop.xlane.xlu0 %422
      %v424 = vsel %vm396, %v363, 0.0
      %425 = vadd.xlane.f32.xlu0 %v424
      %v426 = vpop.xlane.xlu0 %425
      %v427 = vsel %vm396, %v368, 0.0
      %428 = vadd.xlane.f32.xlu0 %v427
      %v429 = vpop.xlane.xlu0 %428
      %v430 = vsel %vm396, %v373, 0.0
      %431 = vadd.xlane.f32.xlu0 %v430
      %v432 = vpop.xlane.xlu0 %431
      %v433 = vsel %vm396, %v378, 0.0
      %434 = vadd.xlane.f32.xlu0 %v433
      %v435 = vpop.xlane.xlu0 %434
      %v436 = vsel %vm396, %v383, 0.0
      %437 = vadd.xlane.f32.xlu0 %v436
      %v438 = vpop.xlane.xlu0 %437
      %v439 = vsel %vm396, %v388, 0.0
      %440 = vadd.xlane.f32.xlu0 %v439
      %v441 = vpop.xlane.xlu0 %440
      %v442 = vsel %vm396, %v393, 0.0
      %443 = vadd.xlane.f32.xlu0 %v442
      %v444 = vpop.xlane.xlu0 %443
      %v445 = vrcp.pop 96.0
      %v446 = vmul.f32 %v399, %v445
      %v447 = vmul.f32 %v402, %v445
      %v448 = vmul.f32 %v405, %v445
      %v449 = vmul.f32 %v408, %v445
      %v450 = vmul.f32 %v411, %v445
      %v451 = vmul.f32 %v414, %v445
      %v452 = vmul.f32 %v417, %v445
      %v453 = vmul.f32 %v420, %v445
      %v454 = vmul.f32 %v423, %v445
      %v455 = vmul.f32 %v426, %v445
      %v456 = vmul.f32 %v429, %v445
      %v457 = vmul.f32 %v432, %v445
      %v458 = vmul.f32 %v435, %v445
      %v459 = vmul.f32 %v438, %v445
      %v460 = vmul.f32 %v441, %v445
      %v461 = vmul.f32 %v444, %v445
      %v462 = vsub.f32 %v318, %v446
      %v463 = vsub.f32 %v323, %v447
      %v464 = vsub.f32 %v328, %v448
      %v465 = vsub.f32 %v333, %v449
      %v466 = vsub.f32 %v338, %v450
      %v467 = vsub.f32 %v343, %v451
      %v468 = vsub.f32 %v348, %v452
      %v469 = vsub.f32 %v353, %v453
      %v470 = vsub.f32 %v358, %v454
      %v471 = vsub.f32 %v363, %v455
      %v472 = vsub.f32 %v368, %v456
      %v473 = vsub.f32 %v373, %v457
      %v474 = vsub.f32 %v378, %v458
      %v475 = vsub.f32 %v383, %v459
      %v476 = vsub.f32 %v388, %v460
      %v477 = vsub.f32 %v393, %v461
      %v478 = vmul.f32 %v462, %v462
      %v479 = vmul.f32 %v463, %v463
      %v480 = vmul.f32 %v464, %v464
      %v481 = vmul.f32 %v465, %v465
      %v482 = vmul.f32 %v466, %v466
      %v483 = vmul.f32 %v467, %v467
      %v484 = vmul.f32 %v468, %v468
      %v485 = vmul.f32 %v469, %v469
      %v486 = vmul.f32 %v470, %v470
      %v487 = vmul.f32 %v471, %v471
      %v488 = vmul.f32 %v472, %v472
      %v489 = vmul.f32 %v473, %v473
      %v490 = vmul.f32 %v474, %v474
      %v491 = vmul.f32 %v475, %v475
      %v492 = vmul.f32 %v476, %v476
      %v493 = vmul.f32 %v477, %v477
      %v494 = vsel %vm396, %v478, 0.0
      %495 = vadd.xlane.f32.xlu0 %v494
      %v496 = vpop.xlane.xlu0 %495
      %v497 = vsel %vm396, %v479, 0.0
      %498 = vadd.xlane.f32.xlu0 %v497
      %v499 = vpop.xlane.xlu0 %498
      %v500 = vsel %vm396, %v480, 0.0
      %501 = vadd.xlane.f32.xlu0 %v500
      %v502 = vpop.xlane.xlu0 %501
      %v503 = vsel %vm396, %v481, 0.0
      %504 = vadd.xlane.f32.xlu0 %v503
      %v505 = vpop.xlane.xlu0 %504
      %v506 = vsel %vm396, %v482, 0.0
      %507 = vadd.xlane.f32.xlu0 %v506
      %v508 = vpop.xlane.xlu0 %507
      %v509 = vsel %vm396, %v483, 0.0
      %510 = vadd.xlane.f32.xlu0 %v509
      %v511 = vpop.xlane.xlu0 %510
      %v512 = vsel %vm396, %v484, 0.0
      %513 = vadd.xlane.f32.xlu0 %v512
      %v514 = vpop.xlane.xlu0 %513
      %v515 = vsel %vm396, %v485, 0.0
      %516 = vadd.xlane.f32.xlu0 %v515
      %v517 = vpop.xlane.xlu0 %516
      %v518 = vsel %vm396, %v486, 0.0
      %519 = vadd.xlane.f32.xlu0 %v518
      %v520 = vpop.xlane.xlu0 %519
      %v521 = vsel %vm396, %v487, 0.0
      %522 = vadd.xlane.f32.xlu0 %v521
      %v523 = vpop.xlane.xlu0 %522
      %v524 = vsel %vm396, %v488, 0.0
      %525 = vadd.xlane.f32.xlu0 %v524
      %v526 = vpop.xlane.xlu0 %525
      %v527 = vsel %vm396, %v489, 0.0
      %528 = vadd.xlane.f32.xlu0 %v527
      %v529 = vpop.xlane.xlu0 %528
      %v530 = vsel %vm396, %v490, 0.0
      %531 = vadd.xlane.f32.xlu0 %v530
      %v532 = vpop.xlane.xlu0 %531
      %v533 = vsel %vm396, %v491, 0.0
      %534 = vadd.xlane.f32.xlu0 %v533
      %v535 = vpop.xlane.xlu0 %534
      %v536 = vsel %vm396, %v492, 0.0
      %537 = vadd.xlane.f32.xlu0 %v536
      %v538 = vpop.xlane.xlu0 %537
      %v539 = vsel %vm396, %v493, 0.0
      %540 = vadd.xlane.f32.xlu0 %v539
      %v541 = vpop.xlane.xlu0 %540
      %v542 = vmul.f32 %v496, %v445
      %v543 = vmul.f32 %v499, %v445
      %v544 = vmul.f32 %v502, %v445
      %v545 = vmul.f32 %v505, %v445
      %v546 = vmul.f32 %v508, %v445
      %v547 = vmul.f32 %v511, %v445
      %v548 = vmul.f32 %v514, %v445
      %v549 = vmul.f32 %v517, %v445
      %v550 = vmul.f32 %v520, %v445
      %v551 = vmul.f32 %v523, %v445
      %v552 = vmul.f32 %v526, %v445
      %v553 = vmul.f32 %v529, %v445
      %v554 = vmul.f32 %v532, %v445
      %v555 = vmul.f32 %v535, %v445
      %v556 = vmul.f32 %v538, %v445
      %v557 = vmul.f32 %v541, %v445
      %v558 = vadd.f32 %v542, 1e-05
      %v559 = vadd.f32 %v543, 1e-05
      %v560 = vadd.f32 %v544, 1e-05
      %v561 = vadd.f32 %v545, 1e-05
      %v562 = vadd.f32 %v546, 1e-05
      %v563 = vadd.f32 %v547, 1e-05
      %v564 = vadd.f32 %v548, 1e-05
      %v565 = vadd.f32 %v549, 1e-05
      %v566 = vadd.f32 %v550, 1e-05
      %v567 = vadd.f32 %v551, 1e-05
      %v568 = vadd.f32 %v552, 1e-05
      %v569 = vadd.f32 %v553, 1e-05
      %v570 = vadd.f32 %v554, 1e-05
      %v571 = vadd.f32 %v555, 1e-05
      %v572 = vadd.f32 %v556, 1e-05
      %v573 = vadd.f32 %v557, 1e-05
      %v574 = vrsqrt.pop %v558
      %v575 = vrsqrt.pop %v559
      %v576 = vrsqrt.pop %v560
      %v577 = vrsqrt.pop %v561
      %v578 = vrsqrt.pop %v562
      %v579 = vrsqrt.pop %v563
      %v580 = vrsqrt.pop %v564
      %v581 = vrsqrt.pop %v565
      %v582 = vrsqrt.pop %v566
      %v583 = vrsqrt.pop %v567
      %v584 = vrsqrt.pop %v568
      %v585 = vrsqrt.pop %v569
      %v586 = vrsqrt.pop %v570
      %v587 = vrsqrt.pop %v571
      %v588 = vrsqrt.pop %v572
      %v589 = vrsqrt.pop %v573
      %v590 = vmul.f32 %v462, %v574
      %v591 = vmul.f32 %v463, %v575
      %v592 = vmul.f32 %v464, %v576
      %v593 = vmul.f32 %v465, %v577
      %v594 = vmul.f32 %v466, %v578
      %v595 = vmul.f32 %v467, %v579
      %v596 = vmul.f32 %v468, %v580
      %v597 = vmul.f32 %v469, %v581
      %v598 = vmul.f32 %v470, %v582
      %v599 = vmul.f32 %v471, %v583
      %v600 = vmul.f32 %v472, %v584
      %v601 = vmul.f32 %v473, %v585
      %v602 = vmul.f32 %v474, %v586
      %v603 = vmul.f32 %v475, %v587
      %v604 = vmul.f32 %v476, %v588
      %v605 = vmul.f32 %v477, %v589
      %v606 = vld [vmem:[%s1 + $0x38] sm:$0xff]
      %v607 = vld [vmem:[%s1 + $0x40] sm:$0xff]
      %v608 = vld [vmem:[%s1 + $0x48] sm:$0xff]
      %v609 = vld [vmem:[%s1 + $0x50] sm:$0xff]
      %v610 = vld [vmem:[%s1 + $0x58] sm:$0xff]
      %v611 = vld [vmem:[%s1 + $0x60] sm:$0xff]
      %v612 = vld [vmem:[%s1 + $0x68] sm:$0xff]
      %v613 = vld [vmem:[%s1 + $0x70] sm:$0xff]
      %v614 = vld [vmem:[%s1 + $0x78] sm:$0xff]
      %v615 = vld [vmem:[%s1 + $0x80] sm:$0xff]
      %v616 = vld [vmem:[%s1 + $0x88] sm:$0xff]
      %v617 = vld [vmem:[%s1 + $0x90] sm:$0xff]
      %v618 = vld [vmem:[%s2 + $0x1] sm:$0x1]
      %v619 = vlaneseq
      %v620 = vshrl.u32 %v619, 7
      %v621 = vsub.s32 0, %v620
      %v622 = vrot.slane %v618, %v621
      %v624 = vsel %vm396, %v590, 0
      %v627 = vsel %vm396, %v591, 0
      %v630 = vsel %vm396, %v592, 0
      %v633 = vsel %vm396, %v593, 0
      %v636 = vsel %vm396, %v594, 0
      %v639 = vsel %vm396, %v595, 0
      %v642 = vsel %vm396, %v596, 0
      %v645 = vsel %vm396, %v597, 0
      %v648 = vsel %vm396, %v598, 0
      %v651 = vsel %vm396, %v599, 0
      %v654 = vsel %vm396, %v600, 0
      %v657 = vsel %vm396, %v601, 0
      %v660 = vsel %vm396, %v602, 0
      %v663 = vsel %vm396, %v603, 0
      %v666 = vsel %vm396, %v604, 0
      %v669 = vsel %vm396, %v605, 0
      %671 = vmatprep.subr.mxu0 0.0
      %672 = vmatpush1.msra.mxu0 0.0
      %673 = vmatprep.subr.mxu0 0.0
      %674 = vmatpush1.msra.mxu0 0.0
      %675 = vmatprep.subr.mxu0 0.0
      %676 = vmatpush1.msra.mxu0 0.0
      %677 = vmatprep.subr.mxu0 0.0
      %678 = vmatpush1.msra.mxu0 0.0
      %679 = vmatprep.subr.mxu0 0.0
      %680 = vmatpush1.msra.mxu0 %v617
      %681 = vmatprep.subr.mxu0 0.0
      %682 = vmatpush1.msra.mxu0 %v616
      %683 = vmatprep.subr.mxu0 0.0
      %684 = vmatpush1.msra.mxu0 %v615
      %685 = vmatprep.subr.mxu0 0.0
      %686 = vmatpush1.msra.mxu0 %v614
      %687 = vmatprep.subr.mxu0 0.0
      %688 = vmatpush1.msra.mxu0 %v613
      %689 = vmatprep.subr.mxu0 0.0
      %690 = vmatpush1.msra.mxu0 %v612
      %691 = vmatprep.subr.mxu0 0.0
      %692 = vmatpush1.msra.mxu0 %v611
      %693 = vmatprep.subr.mxu0 0.0
      %694 = vmatpush1.msra.mxu0 %v610
      %695 = vmatprep.subr.mxu0 0.0
      %696 = vmatpush1.msra.mxu0 %v609
      %697 = vmatprep.subr.mxu0 0.0
      %698 = vmatpush1.msra.mxu0 %v608
      %699 = vmatprep.subr.mxu0 0.0
      %700 = vmatpush1.msra.mxu0 %v607
      %701 = vmatprep.subr.mxu0 0.0
      %702 = vmatpush1.msra.mxu0 %v606
      %703 = vmatprep.subr.mxu0 0.0
      %704 = vmatpush2.msra.mxu0 0.0
      %705 = vmatprep.subr.mxu0 0.0
      %706 = vmatpush2.msra.mxu0 0.0
      %707 = vmatprep.subr.mxu0 0.0
      %708 = vmatpush2.msra.mxu0 0.0
      %709 = vmatprep.subr.mxu0 0.0
      %710 = vmatpush2.msra.mxu0 0.0
      %711 = vmatprep.subr.mxu0 0.0
      %712 = vmatpush2.msra.mxu0 0.0
      %713 = vmatprep.subr.mxu0 0.0
      %714 = vmatpush2.msra.mxu0 0.0
      %715 = vmatprep.subr.mxu0 0.0
      %716 = vmatpush2.msra.mxu0 0.0
      %717 = vmatprep.subr.mxu0 0.0
      %718 = vmatpush2.msra.mxu0 0.0
      %719 = vmatprep.subr.mxu0 0.0
      %720 = vmatpush2.msra.mxu0 0.0
      %721 = vmatprep.subr.mxu0 0.0
      %722 = vmatpush2.msra.mxu0 0.0
      %723 = vmatprep.subr.mxu0 0.0
      %724 = vmatpush2.msra.mxu0 0.0
      %725 = vmatprep.subr.mxu0 0.0
      %726 = vmatpush2.msra.mxu0 0.0
      %727 = vmatprep.subr.mxu0 0.0
      %728 = vmatpush2.msra.mxu0 0.0
      %729 = vmatprep.subr.mxu0 0.0
      %730 = vmatpush2.msra.mxu0 0.0
      %731 = vmatprep.subr.mxu0 0.0
      %732 = vmatpush2.msra.mxu0 0.0
      %733 = vmatprep.subr.mxu0 0.0
      %734 = vmatpush2.msra.mxu0 0.0
      %735 = vmatprep.mubr.f32.mxu0 0.0
      %736 = vmatmul.mubr.f32.gmra.mxu0 %v624
      %v737 = vpop.f32.mrf.mxu0
      %v738 = vadd.f32 %v622, %v737
      %v739 = vpop.f32.mrf.mxu0
      %740 = vmatprep.mubr.f32.mxu0 0.0
      %741 = vmatmul.mubr.f32.gmra.mxu0 %v627
      %v742 = vpop.f32.mrf.mxu0
      %v743 = vadd.f32 %v622, %v742
      %v744 = vpop.f32.mrf.mxu0
      %745 = vmatprep.mubr.f32.mxu0 0.0
      %746 = vmatmul.mubr.f32.gmra.mxu0 %v630
      %v747 = vpop.f32.mrf.mxu0
      %v748 = vadd.f32 %v622, %v747
      %v749 = vpop.f32.mrf.mxu0
      %750 = vmatprep.mubr.f32.mxu0 0.0
      %751 = vmatmul.mubr.f32.gmra.mxu0 %v633
      %v752 = vpop.f32.mrf.mxu0
      %v753 = vadd.f32 %v622, %v752
      %v754 = vpop.f32.mrf.mxu0
      %755 = vmatprep.mubr.f32.mxu0 0.0
      %756 = vmatmul.mubr.f32.gmra.mxu0 %v636
      %v757 = vpop.f32.mrf.mxu0
      %v758 = vadd.f32 %v622, %v757
      %v759 = vpop.f32.mrf.mxu0
      %760 = vmatprep.mubr.f32.mxu0 0.0
      %761 = vmatmul.mubr.f32.gmra.mxu0 %v639
      %v762 = vpop.f32.mrf.mxu0
      %v763 = vadd.f32 %v622, %v762
      %v764 = vpop.f32.mrf.mxu0
      %765 = vmatprep.mubr.f32.mxu0 0.0
      %766 = vmatmul.mubr.f32.gmra.mxu0 %v642
      %v767 = vpop.f32.mrf.mxu0
      %v768 = vadd.f32 %v622, %v767
      %v769 = vpop.f32.mrf.mxu0
      %770 = vmatprep.mubr.f32.mxu0 0.0
      %771 = vmatmul.mubr.f32.gmra.mxu0 %v645
      %v772 = vpop.f32.mrf.mxu0
      %v773 = vadd.f32 %v622, %v772
      %v774 = vpop.f32.mrf.mxu0
      %775 = vmatprep.mubr.f32.mxu0 0.0
      %776 = vmatmul.mubr.f32.gmra.mxu0 %v648
      %v777 = vpop.f32.mrf.mxu0
      %v778 = vadd.f32 %v622, %v777
      %v779 = vpop.f32.mrf.mxu0
      %780 = vmatprep.mubr.f32.mxu0 0.0
      %781 = vmatmul.mubr.f32.gmra.mxu0 %v651
      %v782 = vpop.f32.mrf.mxu0
      %v783 = vadd.f32 %v622, %v782
      %v784 = vpop.f32.mrf.mxu0
      %785 = vmatprep.mubr.f32.mxu0 0.0
      %786 = vmatmul.mubr.f32.gmra.mxu0 %v654
      %v787 = vpop.f32.mrf.mxu0
      %v788 = vadd.f32 %v622, %v787
      %v789 = vpop.f32.mrf.mxu0
      %790 = vmatprep.mubr.f32.mxu0 0.0
      %791 = vmatmul.mubr.f32.gmra.mxu0 %v657
      %v792 = vpop.f32.mrf.mxu0
      %v793 = vadd.f32 %v622, %v792
      %v794 = vpop.f32.mrf.mxu0
      %795 = vmatprep.mubr.f32.mxu0 0.0
      %796 = vmatmul.mubr.f32.gmra.mxu0 %v660
      %v797 = vpop.f32.mrf.mxu0
      %v798 = vadd.f32 %v622, %v797
      %v799 = vpop.f32.mrf.mxu0
      %800 = vmatprep.mubr.f32.mxu0 0.0
      %801 = vmatmul.mubr.f32.gmra.mxu0 %v663
      %v802 = vpop.f32.mrf.mxu0
      %v803 = vadd.f32 %v622, %v802
      %v804 = vpop.f32.mrf.mxu0
      %805 = vmatprep.mubr.f32.mxu0 0.0
      %806 = vmatmul.mubr.f32.gmra.mxu0 %v666
      %v807 = vpop.f32.mrf.mxu0
      %v808 = vadd.f32 %v622, %v807
      %v809 = vpop.f32.mrf.mxu0
      %810 = vmatprep.mubr.f32.mxu0 0.0
      %811 = vmatmul.mubr.f32.gmra.mxu0 %v669
      %v812 = vpop.f32.mrf.mxu0
      %v813 = vadd.f32 %v622, %v812
      %v814 = vpop.f32.mrf.mxu0
      %815 = vdwg.mxu0
      %v816 = vld [vmem:[%s2 + $0x2] sm:$0x1]
      %v817 = vld [vmem:[%s2 + $0x3] sm:$0x1]
      %vm818 = vcmask 523264
      %v819 = vsel %vm818, %v738, 0.0
      %820 = vadd.xlane.f32.xlu0 %v819
      %v821 = vpop.xlane.xlu0 %820
      %v822 = vsel %vm818, %v743, 0.0
      %823 = vadd.xlane.f32.xlu0 %v822
      %v824 = vpop.xlane.xlu0 %823
      %v825 = vsel %vm818, %v748, 0.0
      %826 = vadd.xlane.f32.xlu0 %v825
      %v827 = vpop.xlane.xlu0 %826
      %v828 = vsel %vm818, %v753, 0.0
      %829 = vadd.xlane.f32.xlu0 %v828
      %v830 = vpop.xlane.xlu0 %829
      %v831 = vsel %vm818, %v758, 0.0
      %832 = vadd.xlane.f32.xlu0 %v831
      %v833 = vpop.xlane.xlu0 %832
      %v834 = vsel %vm818, %v763, 0.0
      %835 = vadd.xlane.f32.xlu0 %v834
      %v836 = vpop.xlane.xlu0 %835
      %v837 = vsel %vm818, %v768, 0.0
      %838 = vadd.xlane.f32.xlu0 %v837
      %v839 = vpop.xlane.xlu0 %838
      %v840 = vsel %vm818, %v773, 0.0
      %841 = vadd.xlane.f32.xlu0 %v840
      %v842 = vpop.xlane.xlu0 %841
      %v843 = vsel %vm818, %v778, 0.0
      %844 = vadd.xlane.f32.xlu0 %v843
      %v845 = vpop.xlane.xlu0 %844
      %v846 = vsel %vm818, %v783, 0.0
      %847 = vadd.xlane.f32.xlu0 %v846
      %v848 = vpop.xlane.xlu0 %847
      %v849 = vsel %vm818, %v788, 0.0
      %850 = vadd.xlane.f32.xlu0 %v849
      %v851 = vpop.xlane.xlu0 %850
      %v852 = vsel %vm818, %v793, 0.0
      %853 = vadd.xlane.f32.xlu0 %v852
      %v854 = vpop.xlane.xlu0 %853
      %v855 = vsel %vm818, %v798, 0.0
      %856 = vadd.xlane.f32.xlu0 %v855
      %v857 = vpop.xlane.xlu0 %856
      %v858 = vsel %vm818, %v803, 0.0
      %859 = vadd.xlane.f32.xlu0 %v858
      %v860 = vpop.xlane.xlu0 %859
      %v861 = vsel %vm818, %v808, 0.0
      %862 = vadd.xlane.f32.xlu0 %v861
      %v863 = vpop.xlane.xlu0 %862
      %v864 = vsel %vm818, %v813, 0.0
      %865 = vadd.xlane.f32.xlu0 %v864
      %v866 = vpop.xlane.xlu0 %865
      %v867 = vrcp.pop 64.0
      %v868 = vmul.f32 %v821, %v867
      %v869 = vmul.f32 %v824, %v867
      %v870 = vmul.f32 %v827, %v867
      %v871 = vmul.f32 %v830, %v867
      %v872 = vmul.f32 %v833, %v867
      %v873 = vmul.f32 %v836, %v867
      %v874 = vmul.f32 %v839, %v867
      %v875 = vmul.f32 %v842, %v867
      %v876 = vmul.f32 %v845, %v867
      %v877 = vmul.f32 %v848, %v867
      %v878 = vmul.f32 %v851, %v867
      %v879 = vmul.f32 %v854, %v867
      %v880 = vmul.f32 %v857, %v867
      %v881 = vmul.f32 %v860, %v867
      %v882 = vmul.f32 %v863, %v867
      %v883 = vmul.f32 %v866, %v867
      %v884 = vsub.f32 %v738, %v868
      %v885 = vsub.f32 %v743, %v869
      %v886 = vsub.f32 %v748, %v870
      %v887 = vsub.f32 %v753, %v871
      %v888 = vsub.f32 %v758, %v872
      %v889 = vsub.f32 %v763, %v873
      %v890 = vsub.f32 %v768, %v874
      %v891 = vsub.f32 %v773, %v875
      %v892 = vsub.f32 %v778, %v876
      %v893 = vsub.f32 %v783, %v877
      %v894 = vsub.f32 %v788, %v878
      %v895 = vsub.f32 %v793, %v879
      %v896 = vsub.f32 %v798, %v880
      %v897 = vsub.f32 %v803, %v881
      %v898 = vsub.f32 %v808, %v882
      %v899 = vsub.f32 %v813, %v883
      %v900 = vmul.f32 %v884, %v884
      %v901 = vmul.f32 %v885, %v885
      %v902 = vmul.f32 %v886, %v886
      %v903 = vmul.f32 %v887, %v887
      %v904 = vmul.f32 %v888, %v888
      %v905 = vmul.f32 %v889, %v889
      %v906 = vmul.f32 %v890, %v890
      %v907 = vmul.f32 %v891, %v891
      %v908 = vmul.f32 %v892, %v892
      %v909 = vmul.f32 %v893, %v893
      %v910 = vmul.f32 %v894, %v894
      %v911 = vmul.f32 %v895, %v895
      %v912 = vmul.f32 %v896, %v896
      %v913 = vmul.f32 %v897, %v897
      %v914 = vmul.f32 %v898, %v898
      %v915 = vmul.f32 %v899, %v899
      %v916 = vsel %vm818, %v900, 0.0
      %917 = vadd.xlane.f32.xlu0 %v916
      %v918 = vpop.xlane.xlu0 %917
      %v919 = vsel %vm818, %v901, 0.0
      %920 = vadd.xlane.f32.xlu0 %v919
      %v921 = vpop.xlane.xlu0 %920
      %v922 = vsel %vm818, %v902, 0.0
      %923 = vadd.xlane.f32.xlu0 %v922
      %v924 = vpop.xlane.xlu0 %923
      %v925 = vsel %vm818, %v903, 0.0
      %926 = vadd.xlane.f32.xlu0 %v925
      %v927 = vpop.xlane.xlu0 %926
      %v928 = vsel %vm818, %v904, 0.0
      %929 = vadd.xlane.f32.xlu0 %v928
      %v930 = vpop.xlane.xlu0 %929
      %v931 = vsel %vm818, %v905, 0.0
      %932 = vadd.xlane.f32.xlu0 %v931
      %v933 = vpop.xlane.xlu0 %932
      %v934 = vsel %vm818, %v906, 0.0
      %935 = vadd.xlane.f32.xlu0 %v934
      %v936 = vpop.xlane.xlu0 %935
      %v937 = vsel %vm818, %v907, 0.0
      %938 = vadd.xlane.f32.xlu0 %v937
      %v939 = vpop.xlane.xlu0 %938
      %v940 = vsel %vm818, %v908, 0.0
      %941 = vadd.xlane.f32.xlu0 %v940
      %v942 = vpop.xlane.xlu0 %941
      %v943 = vsel %vm818, %v909, 0.0
      %944 = vadd.xlane.f32.xlu0 %v943
      %v945 = vpop.xlane.xlu0 %944
      %v946 = vsel %vm818, %v910, 0.0
      %947 = vadd.xlane.f32.xlu0 %v946
      %v948 = vpop.xlane.xlu0 %947
      %v949 = vsel %vm818, %v911, 0.0
      %950 = vadd.xlane.f32.xlu0 %v949
      %v951 = vpop.xlane.xlu0 %950
      %v952 = vsel %vm818, %v912, 0.0
      %953 = vadd.xlane.f32.xlu0 %v952
      %v954 = vpop.xlane.xlu0 %953
      %v955 = vsel %vm818, %v913, 0.0
      %956 = vadd.xlane.f32.xlu0 %v955
      %v957 = vpop.xlane.xlu0 %956
      %v958 = vsel %vm818, %v914, 0.0
      %959 = vadd.xlane.f32.xlu0 %v958
      %v960 = vpop.xlane.xlu0 %959
      %v961 = vsel %vm818, %v915, 0.0
      %962 = vadd.xlane.f32.xlu0 %v961
      %v963 = vpop.xlane.xlu0 %962
      %v964 = vmul.f32 %v918, %v867
      %v965 = vmul.f32 %v921, %v867
      %v966 = vmul.f32 %v924, %v867
      %v967 = vmul.f32 %v927, %v867
      %v968 = vmul.f32 %v930, %v867
      %v969 = vmul.f32 %v933, %v867
      %v970 = vmul.f32 %v936, %v867
      %v971 = vmul.f32 %v939, %v867
      %v972 = vmul.f32 %v942, %v867
      %v973 = vmul.f32 %v945, %v867
      %v974 = vmul.f32 %v948, %v867
      %v975 = vmul.f32 %v951, %v867
      %v976 = vmul.f32 %v954, %v867
      %v977 = vmul.f32 %v957, %v867
      %v978 = vmul.f32 %v960, %v867
      %v979 = vmul.f32 %v963, %v867
      %v980 = vadd.f32 %v964, 1e-05
      %v981 = vadd.f32 %v965, 1e-05
      %v982 = vadd.f32 %v966, 1e-05
      %v983 = vadd.f32 %v967, 1e-05
      %v984 = vadd.f32 %v968, 1e-05
      %v985 = vadd.f32 %v969, 1e-05
      %v986 = vadd.f32 %v970, 1e-05
      %v987 = vadd.f32 %v971, 1e-05
      %v988 = vadd.f32 %v972, 1e-05
      %v989 = vadd.f32 %v973, 1e-05
      %v990 = vadd.f32 %v974, 1e-05
      %v991 = vadd.f32 %v975, 1e-05
      %v992 = vadd.f32 %v976, 1e-05
      %v993 = vadd.f32 %v977, 1e-05
      %v994 = vadd.f32 %v978, 1e-05
      %v995 = vadd.f32 %v979, 1e-05
      %v996 = vrsqrt.pop %v980
      %v997 = vrsqrt.pop %v981
      %v998 = vrsqrt.pop %v982
      %v999 = vrsqrt.pop %v983
      %v1000 = vrsqrt.pop %v984
      %v1001 = vrsqrt.pop %v985
      %v1002 = vrsqrt.pop %v986
      %v1003 = vrsqrt.pop %v987
      %v1004 = vrsqrt.pop %v988
      %v1005 = vrsqrt.pop %v989
      %v1006 = vrsqrt.pop %v990
      %v1007 = vrsqrt.pop %v991
      %v1008 = vrsqrt.pop %v992
      %v1009 = vrsqrt.pop %v993
      %v1010 = vrsqrt.pop %v994
      %v1011 = vrsqrt.pop %v995
      %v1012 = vmul.f32 %v884, %v996
      %v1013 = vmul.f32 %v885, %v997
      %v1014 = vmul.f32 %v886, %v998
      %v1015 = vmul.f32 %v887, %v999
      %v1016 = vmul.f32 %v888, %v1000
      %v1017 = vmul.f32 %v889, %v1001
      %v1018 = vmul.f32 %v890, %v1002
      %v1019 = vmul.f32 %v891, %v1003
      %v1020 = vmul.f32 %v892, %v1004
      %v1021 = vmul.f32 %v893, %v1005
      %v1022 = vmul.f32 %v894, %v1006
      %v1023 = vmul.f32 %v895, %v1007
      %v1024 = vmul.f32 %v896, %v1008
      %v1025 = vmul.f32 %v897, %v1009
      %v1026 = vmul.f32 %v898, %v1010
      %v1027 = vmul.f32 %v899, %v1011
      %v1028 = vlaneseq
      %v1029 = vshrl.u32 %v1028, 7
      %v1030 = vsub.s32 0, %v1029
      %v1031 = vrot.slane %v816, %v1030
      %v1032 = vmul.f32 %v1012, %v1031
      %v1033 = vmul.f32 %v1013, %v1031
      %v1034 = vmul.f32 %v1014, %v1031
      %v1035 = vmul.f32 %v1015, %v1031
      %v1036 = vmul.f32 %v1016, %v1031
      %v1037 = vmul.f32 %v1017, %v1031
      %v1038 = vmul.f32 %v1018, %v1031
      %v1039 = vmul.f32 %v1019, %v1031
      %v1040 = vmul.f32 %v1020, %v1031
      %v1041 = vmul.f32 %v1021, %v1031
      %v1042 = vmul.f32 %v1022, %v1031
      %v1043 = vmul.f32 %v1023, %v1031
      %v1044 = vmul.f32 %v1024, %v1031
      %v1045 = vmul.f32 %v1025, %v1031
      %v1046 = vmul.f32 %v1026, %v1031
      %v1047 = vmul.f32 %v1027, %v1031
      %v1048 = vlaneseq
      %v1049 = vshrl.u32 %v1048, 7
      %v1050 = vsub.s32 0, %v1049
      %v1051 = vrot.slane %v817, %v1050
      %v1052 = vadd.f32 %v1032, %v1051
      %v1053 = vadd.f32 %v1033, %v1051
      %v1054 = vadd.f32 %v1034, %v1051
      %v1055 = vadd.f32 %v1035, %v1051
      %v1056 = vadd.f32 %v1036, %v1051
      %v1057 = vadd.f32 %v1037, %v1051
      %v1058 = vadd.f32 %v1038, %v1051
      %v1059 = vadd.f32 %v1039, %v1051
      %v1060 = vadd.f32 %v1040, %v1051
      %v1061 = vadd.f32 %v1041, %v1051
      %v1062 = vadd.f32 %v1042, %v1051
      %v1063 = vadd.f32 %v1043, %v1051
      %v1064 = vadd.f32 %v1044, %v1051
      %v1065 = vadd.f32 %v1045, %v1051
      %v1066 = vadd.f32 %v1046, %v1051
      %v1067 = vadd.f32 %v1047, %v1051
      %v1068 = vmax.f32 %v1052, 0.0
      %v1069 = vmax.f32 %v1053, 0.0
      %v1070 = vmax.f32 %v1054, 0.0
      %v1071 = vmax.f32 %v1055, 0.0
      %v1072 = vmax.f32 %v1056, 0.0
      %v1073 = vmax.f32 %v1057, 0.0
      %v1074 = vmax.f32 %v1058, 0.0
      %v1075 = vmax.f32 %v1059, 0.0
      %v1076 = vmax.f32 %v1060, 0.0
      %v1077 = vmax.f32 %v1061, 0.0
      %v1078 = vmax.f32 %v1062, 0.0
      %v1079 = vmax.f32 %v1063, 0.0
      %v1080 = vmax.f32 %v1064, 0.0
      %v1081 = vmax.f32 %v1065, 0.0
      %v1082 = vmax.f32 %v1066, 0.0
      %v1083 = vmax.f32 %v1067, 0.0
      %v1084 = vld [vmem:[%s1 + $0x98] sm:$0xff]
      %v1085 = vld [vmem:[%s1 + $0xa0] sm:$0xff]
      %v1086 = vld [vmem:[%s1 + $0xa8] sm:$0xff]
      %v1087 = vld [vmem:[%s1 + $0xb0] sm:$0xff]
      %v1088 = vld [vmem:[%s1 + $0xb8] sm:$0xff]
      %v1089 = vld [vmem:[%s1 + $0xc0] sm:$0xff]
      %v1090 = vld [vmem:[%s1 + $0xc8] sm:$0xff]
      %v1091 = vld [vmem:[%s1 + $0xd0] sm:$0xff]
      %v1092 = vld [vmem:[%s2 + $0x4] sm:$0x1]
      %v1093 = vlaneseq
      %v1094 = vshrl.u32 %v1093, 7
      %v1095 = vsub.s32 0, %v1094
      %v1096 = vrot.slane %v1092, %v1095
      %v1098 = vsel %vm818, %v1068, 0
      %v1101 = vsel %vm818, %v1069, 0
      %v1104 = vsel %vm818, %v1070, 0
      %v1107 = vsel %vm818, %v1071, 0
      %v1110 = vsel %vm818, %v1072, 0
      %v1113 = vsel %vm818, %v1073, 0
      %v1116 = vsel %vm818, %v1074, 0
      %v1119 = vsel %vm818, %v1075, 0
      %v1122 = vsel %vm818, %v1076, 0
      %v1125 = vsel %vm818, %v1077, 0
      %v1128 = vsel %vm818, %v1078, 0
      %v1131 = vsel %vm818, %v1079, 0
      %v1134 = vsel %vm818, %v1080, 0
      %v1137 = vsel %vm818, %v1081, 0
      %v1140 = vsel %vm818, %v1082, 0
      %v1143 = vsel %vm818, %v1083, 0
      %1145 = vmatprep.subr.mxu0 0.0
      %1146 = vmatpush1.msra.mxu0 0.0
      %1147 = vmatprep.subr.mxu0 0.0
      %1148 = vmatpush1.msra.mxu0 0.0
      %1149 = vmatprep.subr.mxu0 0.0
      %1150 = vmatpush1.msra.mxu0 0.0
      %1151 = vmatprep.subr.mxu0 0.0
      %1152 = vmatpush1.msra.mxu0 0.0
      %1153 = vmatprep.subr.mxu0 0.0
      %1154 = vmatpush1.msra.mxu0 0.0
      %1155 = vmatprep.subr.mxu0 0.0
      %1156 = vmatpush1.msra.mxu0 0.0
      %1157 = vmatprep.subr.mxu0 0.0
      %1158 = vmatpush1.msra.mxu0 0.0
      %1159 = vmatprep.subr.mxu0 0.0
      %1160 = vmatpush1.msra.mxu0 0.0
      %1161 = vmatprep.subr.mxu0 0.0
      %1162 = vmatpush1.msra.mxu0 %v1091
      %1163 = vmatprep.subr.mxu0 0.0
      %1164 = vmatpush1.msra.mxu0 %v1090
      %1165 = vmatprep.subr.mxu0 0.0
      %1166 = vmatpush1.msra.mxu0 %v1089
      %1167 = vmatprep.subr.mxu0 0.0
      %1168 = vmatpush1.msra.mxu0 %v1088
      %1169 = vmatprep.subr.mxu0 0.0
      %1170 = vmatpush1.msra.mxu0 %v1087
      %1171 = vmatprep.subr.mxu0 0.0
      %1172 = vmatpush1.msra.mxu0 %v1086
      %1173 = vmatprep.subr.mxu0 0.0
      %1174 = vmatpush1.msra.mxu0 %v1085
      %1175 = vmatprep.subr.mxu0 0.0
      %1176 = vmatpush1.msra.mxu0 %v1084
      %1177 = vmatprep.subr.mxu0 0.0
      %1178 = vmatpush2.msra.mxu0 0.0
      %1179 = vmatprep.subr.mxu0 0.0
      %1180 = vmatpush2.msra.mxu0 0.0
      %1181 = vmatprep.subr.mxu0 0.0
      %1182 = vmatpush2.msra.mxu0 0.0
      %1183 = vmatprep.subr.mxu0 0.0
      %1184 = vmatpush2.msra.mxu0 0.0
      %1185 = vmatprep.subr.mxu0 0.0
      %1186 = vmatpush2.msra.mxu0 0.0
      %1187 = vmatprep.subr.mxu0 0.0
      %1188 = vmatpush2.msra.mxu0 0.0
      %1189 = vmatprep.subr.mxu0 0.0
      %1190 = vmatpush2.msra.mxu0 0.0
      %1191 = vmatprep.subr.mxu0 0.0
      %1192 = vmatpush2.msra.mxu0 0.0
      %1193 = vmatprep.subr.mxu0 0.0
      %1194 = vmatpush2.msra.mxu0 0.0
      %1195 = vmatprep.subr.mxu0 0.0
      %1196 = vmatpush2.msra.mxu0 0.0
      %1197 = vmatprep.subr.mxu0 0.0
      %1198 = vmatpush2.msra.mxu0 0.0
      %1199 = vmatprep.subr.mxu0 0.0
      %1200 = vmatpush2.msra.mxu0 0.0
      %1201 = vmatprep.subr.mxu0 0.0
      %1202 = vmatpush2.msra.mxu0 0.0
      %1203 = vmatprep.subr.mxu0 0.0
      %1204 = vmatpush2.msra.mxu0 0.0
      %1205 = vmatprep.subr.mxu0 0.0
      %1206 = vmatpush2.msra.mxu0 0.0
      %1207 = vmatprep.subr.mxu0 0.0
      %1208 = vmatpush2.msra.mxu0 0.0
      %1209 = vmatprep.mubr.f32.mxu0 0.0
      %1210 = vmatmul.mubr.f32.gmra.mxu0 %v1098
      %v1211 = vpop.f32.mrf.mxu0
      %v1212 = vadd.f32 %v1096, %v1211
      %v1213 = vpop.f32.mrf.mxu0
      %1214 = vmatprep.mubr.f32.mxu0 0.0
      %1215 = vmatmul.mubr.f32.gmra.mxu0 %v1101
      %v1216 = vpop.f32.mrf.mxu0
      %v1217 = vadd.f32 %v1096, %v1216
      %v1218 = vpop.f32.mrf.mxu0
      %1219 = vmatprep.mubr.f32.mxu0 0.0
      %1220 = vmatmul.mubr.f32.gmra.mxu0 %v1104
      %v1221 = vpop.f32.mrf.mxu0
      %v1222 = vadd.f32 %v1096, %v1221
      %v1223 = vpop.f32.mrf.mxu0
      %1224 = vmatprep.mubr.f32.mxu0 0.0
      %1225 = vmatmul.mubr.f32.gmra.mxu0 %v1107
      %v1226 = vpop.f32.mrf.mxu0
      %v1227 = vadd.f32 %v1096, %v1226
      %v1228 = vpop.f32.mrf.mxu0
      %1229 = vmatprep.mubr.f32.mxu0 0.0
      %1230 = vmatmul.mubr.f32.gmra.mxu0 %v1110
      %v1231 = vpop.f32.mrf.mxu0
      %v1232 = vadd.f32 %v1096, %v1231
      %v1233 = vpop.f32.mrf.mxu0
      %1234 = vmatprep.mubr.f32.mxu0 0.0
      %1235 = vmatmul.mubr.f32.gmra.mxu0 %v1113
      %v1236 = vpop.f32.mrf.mxu0
      %v1237 = vadd.f32 %v1096, %v1236
      %v1238 = vpop.f32.mrf.mxu0
      %1239 = vmatprep.mubr.f32.mxu0 0.0
      %1240 = vmatmul.mubr.f32.gmra.mxu0 %v1116
      %v1241 = vpop.f32.mrf.mxu0
      %v1242 = vadd.f32 %v1096, %v1241
      %v1243 = vpop.f32.mrf.mxu0
      %1244 = vmatprep.mubr.f32.mxu0 0.0
      %1245 = vmatmul.mubr.f32.gmra.mxu0 %v1119
      %v1246 = vpop.f32.mrf.mxu0
      %v1247 = vadd.f32 %v1096, %v1246
      %v1248 = vpop.f32.mrf.mxu0
      %1249 = vmatprep.mubr.f32.mxu0 0.0
      %1250 = vmatmul.mubr.f32.gmra.mxu0 %v1122
      %v1251 = vpop.f32.mrf.mxu0
      %v1252 = vadd.f32 %v1096, %v1251
      %v1253 = vpop.f32.mrf.mxu0
      %1254 = vmatprep.mubr.f32.mxu0 0.0
      %1255 = vmatmul.mubr.f32.gmra.mxu0 %v1125
      %v1256 = vpop.f32.mrf.mxu0
      %v1257 = vadd.f32 %v1096, %v1256
      %v1258 = vpop.f32.mrf.mxu0
      %1259 = vmatprep.mubr.f32.mxu0 0.0
      %1260 = vmatmul.mubr.f32.gmra.mxu0 %v1128
      %v1261 = vpop.f32.mrf.mxu0
      %v1262 = vadd.f32 %v1096, %v1261
      %v1263 = vpop.f32.mrf.mxu0
      %1264 = vmatprep.mubr.f32.mxu0 0.0
      %1265 = vmatmul.mubr.f32.gmra.mxu0 %v1131
      %v1266 = vpop.f32.mrf.mxu0
      %v1267 = vadd.f32 %v1096, %v1266
      %v1268 = vpop.f32.mrf.mxu0
      %1269 = vmatprep.mubr.f32.mxu0 0.0
      %1270 = vmatmul.mubr.f32.gmra.mxu0 %v1134
      %v1271 = vpop.f32.mrf.mxu0
      %v1272 = vadd.f32 %v1096, %v1271
      %v1273 = vpop.f32.mrf.mxu0
      %1274 = vmatprep.mubr.f32.mxu0 0.0
      %1275 = vmatmul.mubr.f32.gmra.mxu0 %v1137
      %v1276 = vpop.f32.mrf.mxu0
      %v1277 = vadd.f32 %v1096, %v1276
      %v1278 = vpop.f32.mrf.mxu0
      %1279 = vmatprep.mubr.f32.mxu0 0.0
      %1280 = vmatmul.mubr.f32.gmra.mxu0 %v1140
      %v1281 = vpop.f32.mrf.mxu0
      %v1282 = vadd.f32 %v1096, %v1281
      %v1283 = vpop.f32.mrf.mxu0
      %1284 = vmatprep.mubr.f32.mxu0 0.0
      %1285 = vmatmul.mubr.f32.gmra.mxu0 %v1143
      %v1286 = vpop.f32.mrf.mxu0
      %v1287 = vadd.f32 %v1096, %v1286
      %v1288 = vpop.f32.mrf.mxu0
      %1289 = vdwg.mxu0
      %v1290 = vld [vmem:[%s2 + $0x5] sm:$0x1]
      %v1291 = vld [vmem:[%s2 + $0x6] sm:$0x1]
      %v1292 = vsel %vm818, %v1212, 0.0
      %1293 = vadd.xlane.f32.xlu0 %v1292
      %v1294 = vpop.xlane.xlu0 %1293
      %v1295 = vsel %vm818, %v1217, 0.0
      %1296 = vadd.xlane.f32.xlu0 %v1295
      %v1297 = vpop.xlane.xlu0 %1296
      %v1298 = vsel %vm818, %v1222, 0.0
      %1299 = vadd.xlane.f32.xlu0 %v1298
      %v1300 = vpop.xlane.xlu0 %1299
      %v1301 = vsel %vm818, %v1227, 0.0
      %1302 = vadd.xlane.f32.xlu0 %v1301
      %v1303 = vpop.xlane.xlu0 %1302
      %v1304 = vsel %vm818, %v1232, 0.0
      %1305 = vadd.xlane.f32.xlu0 %v1304
      %v1306 = vpop.xlane.xlu0 %1305
      %v1307 = vsel %vm818, %v1237, 0.0
      %1308 = vadd.xlane.f32.xlu0 %v1307
      %v1309 = vpop.xlane.xlu0 %1308
      %v1310 = vsel %vm818, %v1242, 0.0
      %1311 = vadd.xlane.f32.xlu0 %v1310
      %v1312 = vpop.xlane.xlu0 %1311
      %v1313 = vsel %vm818, %v1247, 0.0
      %1314 = vadd.xlane.f32.xlu0 %v1313
      %v1315 = vpop.xlane.xlu0 %1314
      %v1316 = vsel %vm818, %v1252, 0.0
      %1317 = vadd.xlane.f32.xlu0 %v1316
      %v1318 = vpop.xlane.xlu0 %1317
      %v1319 = vsel %vm818, %v1257, 0.0
      %1320 = vadd.xlane.f32.xlu0 %v1319
      %v1321 = vpop.xlane.xlu0 %1320
      %v1322 = vsel %vm818, %v1262, 0.0
      %1323 = vadd.xlane.f32.xlu0 %v1322
      %v1324 = vpop.xlane.xlu0 %1323
      %v1325 = vsel %vm818, %v1267, 0.0
      %1326 = vadd.xlane.f32.xlu0 %v1325
      %v1327 = vpop.xlane.xlu0 %1326
      %v1328 = vsel %vm818, %v1272, 0.0
      %1329 = vadd.xlane.f32.xlu0 %v1328
      %v1330 = vpop.xlane.xlu0 %1329
      %v1331 = vsel %vm818, %v1277, 0.0
      %1332 = vadd.xlane.f32.xlu0 %v1331
      %v1333 = vpop.xlane.xlu0 %1332
      %v1334 = vsel %vm818, %v1282, 0.0
      %1335 = vadd.xlane.f32.xlu0 %v1334
      %v1336 = vpop.xlane.xlu0 %1335
      %v1337 = vsel %vm818, %v1287, 0.0
      %1338 = vadd.xlane.f32.xlu0 %v1337
      %v1339 = vpop.xlane.xlu0 %1338
      %v1340 = vmul.f32 %v1294, %v867
      %v1341 = vmul.f32 %v1297, %v867
      %v1342 = vmul.f32 %v1300, %v867
      %v1343 = vmul.f32 %v1303, %v867
      %v1344 = vmul.f32 %v1306, %v867
      %v1345 = vmul.f32 %v1309, %v867
      %v1346 = vmul.f32 %v1312, %v867
      %v1347 = vmul.f32 %v1315, %v867
      %v1348 = vmul.f32 %v1318, %v867
      %v1349 = vmul.f32 %v1321, %v867
      %v1350 = vmul.f32 %v1324, %v867
      %v1351 = vmul.f32 %v1327, %v867
      %v1352 = vmul.f32 %v1330, %v867
      %v1353 = vmul.f32 %v1333, %v867
      %v1354 = vmul.f32 %v1336, %v867
      %v1355 = vmul.f32 %v1339, %v867
      %v1356 = vsub.f32 %v1212, %v1340
      %v1357 = vsub.f32 %v1217, %v1341
      %v1358 = vsub.f32 %v1222, %v1342
      %v1359 = vsub.f32 %v1227, %v1343
      %v1360 = vsub.f32 %v1232, %v1344
      %v1361 = vsub.f32 %v1237, %v1345
      %v1362 = vsub.f32 %v1242, %v1346
      %v1363 = vsub.f32 %v1247, %v1347
      %v1364 = vsub.f32 %v1252, %v1348
      %v1365 = vsub.f32 %v1257, %v1349
      %v1366 = vsub.f32 %v1262, %v1350
      %v1367 = vsub.f32 %v1267, %v1351
      %v1368 = vsub.f32 %v1272, %v1352
      %v1369 = vsub.f32 %v1277, %v1353
      %v1370 = vsub.f32 %v1282, %v1354
      %v1371 = vsub.f32 %v1287, %v1355
      %v1372 = vmul.f32 %v1356, %v1356
      %v1373 = vmul.f32 %v1357, %v1357
      %v1374 = vmul.f32 %v1358, %v1358
      %v1375 = vmul.f32 %v1359, %v1359
      %v1376 = vmul.f32 %v1360, %v1360
      %v1377 = vmul.f32 %v1361, %v1361
      %v1378 = vmul.f32 %v1362, %v1362
      %v1379 = vmul.f32 %v1363, %v1363
      %v1380 = vmul.f32 %v1364, %v1364
      %v1381 = vmul.f32 %v1365, %v1365
      %v1382 = vmul.f32 %v1366, %v1366
      %v1383 = vmul.f32 %v1367, %v1367
      %v1384 = vmul.f32 %v1368, %v1368
      %v1385 = vmul.f32 %v1369, %v1369
      %v1386 = vmul.f32 %v1370, %v1370
      %v1387 = vmul.f32 %v1371, %v1371
      %v1388 = vsel %vm818, %v1372, 0.0
      %1389 = vadd.xlane.f32.xlu0 %v1388
      %v1390 = vpop.xlane.xlu0 %1389
      %v1391 = vsel %vm818, %v1373, 0.0
      %1392 = vadd.xlane.f32.xlu0 %v1391
      %v1393 = vpop.xlane.xlu0 %1392
      %v1394 = vsel %vm818, %v1374, 0.0
      %1395 = vadd.xlane.f32.xlu0 %v1394
      %v1396 = vpop.xlane.xlu0 %1395
      %v1397 = vsel %vm818, %v1375, 0.0
      %1398 = vadd.xlane.f32.xlu0 %v1397
      %v1399 = vpop.xlane.xlu0 %1398
      %v1400 = vsel %vm818, %v1376, 0.0
      %1401 = vadd.xlane.f32.xlu0 %v1400
      %v1402 = vpop.xlane.xlu0 %1401
      %v1403 = vsel %vm818, %v1377, 0.0
      %1404 = vadd.xlane.f32.xlu0 %v1403
      %v1405 = vpop.xlane.xlu0 %1404
      %v1406 = vsel %vm818, %v1378, 0.0
      %1407 = vadd.xlane.f32.xlu0 %v1406
      %v1408 = vpop.xlane.xlu0 %1407
      %v1409 = vsel %vm818, %v1379, 0.0
      %1410 = vadd.xlane.f32.xlu0 %v1409
      %v1411 = vpop.xlane.xlu0 %1410
      %v1412 = vsel %vm818, %v1380, 0.0
      %1413 = vadd.xlane.f32.xlu0 %v1412
      %v1414 = vpop.xlane.xlu0 %1413
      %v1415 = vsel %vm818, %v1381, 0.0
      %1416 = vadd.xlane.f32.xlu0 %v1415
      %v1417 = vpop.xlane.xlu0 %1416
      %v1418 = vsel %vm818, %v1382, 0.0
      %1419 = vadd.xlane.f32.xlu0 %v1418
      %v1420 = vpop.xlane.xlu0 %1419
      %v1421 = vsel %vm818, %v1383, 0.0
      %1422 = vadd.xlane.f32.xlu0 %v1421
      %v1423 = vpop.xlane.xlu0 %1422
      %v1424 = vsel %vm818, %v1384, 0.0
      %1425 = vadd.xlane.f32.xlu0 %v1424
      %v1426 = vpop.xlane.xlu0 %1425
      %v1427 = vsel %vm818, %v1385, 0.0
      %1428 = vadd.xlane.f32.xlu0 %v1427
      %v1429 = vpop.xlane.xlu0 %1428
      %v1430 = vsel %vm818, %v1386, 0.0
      %1431 = vadd.xlane.f32.xlu0 %v1430
      %v1432 = vpop.xlane.xlu0 %1431
      %v1433 = vsel %vm818, %v1387, 0.0
      %1434 = vadd.xlane.f32.xlu0 %v1433
      %v1435 = vpop.xlane.xlu0 %1434
      %v1436 = vmul.f32 %v1390, %v867
      %v1437 = vmul.f32 %v1393, %v867
      %v1438 = vmul.f32 %v1396, %v867
      %v1439 = vmul.f32 %v1399, %v867
      %v1440 = vmul.f32 %v1402, %v867
      %v1441 = vmul.f32 %v1405, %v867
      %v1442 = vmul.f32 %v1408, %v867
      %v1443 = vmul.f32 %v1411, %v867
      %v1444 = vmul.f32 %v1414, %v867
      %v1445 = vmul.f32 %v1417, %v867
      %v1446 = vmul.f32 %v1420, %v867
      %v1447 = vmul.f32 %v1423, %v867
      %v1448 = vmul.f32 %v1426, %v867
      %v1449 = vmul.f32 %v1429, %v867
      %v1450 = vmul.f32 %v1432, %v867
      %v1451 = vmul.f32 %v1435, %v867
      %v1452 = vadd.f32 %v1436, 1e-05
      %v1453 = vadd.f32 %v1437, 1e-05
      %v1454 = vadd.f32 %v1438, 1e-05
      %v1455 = vadd.f32 %v1439, 1e-05
      %v1456 = vadd.f32 %v1440, 1e-05
      %v1457 = vadd.f32 %v1441, 1e-05
      %v1458 = vadd.f32 %v1442, 1e-05
      %v1459 = vadd.f32 %v1443, 1e-05
      %v1460 = vadd.f32 %v1444, 1e-05
      %v1461 = vadd.f32 %v1445, 1e-05
      %v1462 = vadd.f32 %v1446, 1e-05
      %v1463 = vadd.f32 %v1447, 1e-05
      %v1464 = vadd.f32 %v1448, 1e-05
      %v1465 = vadd.f32 %v1449, 1e-05
      %v1466 = vadd.f32 %v1450, 1e-05
      %v1467 = vadd.f32 %v1451, 1e-05
      %v1468 = vrsqrt.pop %v1452
      %v1469 = vrsqrt.pop %v1453
      %v1470 = vrsqrt.pop %v1454
      %v1471 = vrsqrt.pop %v1455
      %v1472 = vrsqrt.pop %v1456
      %v1473 = vrsqrt.pop %v1457
      %v1474 = vrsqrt.pop %v1458
      %v1475 = vrsqrt.pop %v1459
      %v1476 = vrsqrt.pop %v1460
      %v1477 = vrsqrt.pop %v1461
      %v1478 = vrsqrt.pop %v1462
      %v1479 = vrsqrt.pop %v1463
      %v1480 = vrsqrt.pop %v1464
      %v1481 = vrsqrt.pop %v1465
      %v1482 = vrsqrt.pop %v1466
      %v1483 = vrsqrt.pop %v1467
      %v1484 = vmul.f32 %v1356, %v1468
      %v1485 = vmul.f32 %v1357, %v1469
      %v1486 = vmul.f32 %v1358, %v1470
      %v1487 = vmul.f32 %v1359, %v1471
      %v1488 = vmul.f32 %v1360, %v1472
      %v1489 = vmul.f32 %v1361, %v1473
      %v1490 = vmul.f32 %v1362, %v1474
      %v1491 = vmul.f32 %v1363, %v1475
      %v1492 = vmul.f32 %v1364, %v1476
      %v1493 = vmul.f32 %v1365, %v1477
      %v1494 = vmul.f32 %v1366, %v1478
      %v1495 = vmul.f32 %v1367, %v1479
      %v1496 = vmul.f32 %v1368, %v1480
      %v1497 = vmul.f32 %v1369, %v1481
      %v1498 = vmul.f32 %v1370, %v1482
      %v1499 = vmul.f32 %v1371, %v1483
      %v1500 = vlaneseq
      %v1501 = vshrl.u32 %v1500, 7
      %v1502 = vsub.s32 0, %v1501
      %v1503 = vrot.slane %v1290, %v1502
      %v1504 = vmul.f32 %v1484, %v1503
      %v1505 = vmul.f32 %v1485, %v1503
      %v1506 = vmul.f32 %v1486, %v1503
      %v1507 = vmul.f32 %v1487, %v1503
      %v1508 = vmul.f32 %v1488, %v1503
      %v1509 = vmul.f32 %v1489, %v1503
      %v1510 = vmul.f32 %v1490, %v1503
      %v1511 = vmul.f32 %v1491, %v1503
      %v1512 = vmul.f32 %v1492, %v1503
      %v1513 = vmul.f32 %v1493, %v1503
      %v1514 = vmul.f32 %v1494, %v1503
      %v1515 = vmul.f32 %v1495, %v1503
      %v1516 = vmul.f32 %v1496, %v1503
      %v1517 = vmul.f32 %v1497, %v1503
      %v1518 = vmul.f32 %v1498, %v1503
      %v1519 = vmul.f32 %v1499, %v1503
      %v1520 = vlaneseq
      %v1521 = vshrl.u32 %v1520, 7
      %v1522 = vsub.s32 0, %v1521
      %v1523 = vrot.slane %v1291, %v1522
      %v1524 = vadd.f32 %v1504, %v1523
      %v1525 = vadd.f32 %v1505, %v1523
      %v1526 = vadd.f32 %v1506, %v1523
      %v1527 = vadd.f32 %v1507, %v1523
      %v1528 = vadd.f32 %v1508, %v1523
      %v1529 = vadd.f32 %v1509, %v1523
      %v1530 = vadd.f32 %v1510, %v1523
      %v1531 = vadd.f32 %v1511, %v1523
      %v1532 = vadd.f32 %v1512, %v1523
      %v1533 = vadd.f32 %v1513, %v1523
      %v1534 = vadd.f32 %v1514, %v1523
      %v1535 = vadd.f32 %v1515, %v1523
      %v1536 = vadd.f32 %v1516, %v1523
      %v1537 = vadd.f32 %v1517, %v1523
      %v1538 = vadd.f32 %v1518, %v1523
      %v1539 = vadd.f32 %v1519, %v1523
      %v1540 = vmax.f32 %v1524, 0.0
      %v1541 = vmax.f32 %v1525, 0.0
      %v1542 = vmax.f32 %v1526, 0.0
      %v1543 = vmax.f32 %v1527, 0.0
      %v1544 = vmax.f32 %v1528, 0.0
      %v1545 = vmax.f32 %v1529, 0.0
      %v1546 = vmax.f32 %v1530, 0.0
      %v1547 = vmax.f32 %v1531, 0.0
      %v1548 = vmax.f32 %v1532, 0.0
      %v1549 = vmax.f32 %v1533, 0.0
      %v1550 = vmax.f32 %v1534, 0.0
      %v1551 = vmax.f32 %v1535, 0.0
      %v1552 = vmax.f32 %v1536, 0.0
      %v1553 = vmax.f32 %v1537, 0.0
      %v1554 = vmax.f32 %v1538, 0.0
      %v1555 = vmax.f32 %v1539, 0.0
      %v1556 = vld [vmem:[%s1 + $0xd8] sm:$0xff]
      %v1557 = vld [vmem:[%s1 + $0xe0] sm:$0xff]
      %v1558 = vld [vmem:[%s1 + $0xe8] sm:$0xff]
      %v1559 = vld [vmem:[%s1 + $0xf0] sm:$0xff]
      %v1560 = vld [vmem:[%s1 + $0xf8] sm:$0xff]
      %v1561 = vld [vmem:[%s1 + $0x100] sm:$0xff]
      %v1562 = vld [vmem:[%s1 + $0x108] sm:$0xff]
      %v1563 = vld [vmem:[%s1 + $0x110] sm:$0xff]
      %v1564 = vld [vmem:[%s2 + $0x7] sm:$0x1]
      %v1565 = vlaneseq
      %v1566 = vshrl.u32 %v1565, 7
      %v1567 = vsub.s32 0, %v1566
      %v1568 = vrot.slane %v1564, %v1567
      %v1570 = vsel %vm818, %v1540, 0
      %v1573 = vsel %vm818, %v1541, 0
      %v1576 = vsel %vm818, %v1542, 0
      %v1579 = vsel %vm818, %v1543, 0
      %v1582 = vsel %vm818, %v1544, 0
      %v1585 = vsel %vm818, %v1545, 0
      %v1588 = vsel %vm818, %v1546, 0
      %v1591 = vsel %vm818, %v1547, 0
      %v1594 = vsel %vm818, %v1548, 0
      %v1597 = vsel %vm818, %v1549, 0
      %v1600 = vsel %vm818, %v1550, 0
      %v1603 = vsel %vm818, %v1551, 0
      %v1606 = vsel %vm818, %v1552, 0
      %v1609 = vsel %vm818, %v1553, 0
      %v1612 = vsel %vm818, %v1554, 0
      %v1615 = vsel %vm818, %v1555, 0
      %1617 = vmatprep.subr.mxu0 0.0
      %1618 = vmatpush1.msra.mxu0 0.0
      %1619 = vmatprep.subr.mxu0 0.0
      %1620 = vmatpush1.msra.mxu0 0.0
      %1621 = vmatprep.subr.mxu0 0.0
      %1622 = vmatpush1.msra.mxu0 0.0
      %1623 = vmatprep.subr.mxu0 0.0
      %1624 = vmatpush1.msra.mxu0 0.0
      %1625 = vmatprep.subr.mxu0 0.0
      %1626 = vmatpush1.msra.mxu0 0.0
      %1627 = vmatprep.subr.mxu0 0.0
      %1628 = vmatpush1.msra.mxu0 0.0
      %1629 = vmatprep.subr.mxu0 0.0
      %1630 = vmatpush1.msra.mxu0 0.0
      %1631 = vmatprep.subr.mxu0 0.0
      %1632 = vmatpush1.msra.mxu0 0.0
      %1633 = vmatprep.subr.mxu0 0.0
      %1634 = vmatpush1.msra.mxu0 %v1563
      %1635 = vmatprep.subr.mxu0 0.0
      %1636 = vmatpush1.msra.mxu0 %v1562
      %1637 = vmatprep.subr.mxu0 0.0
      %1638 = vmatpush1.msra.mxu0 %v1561
      %1639 = vmatprep.subr.mxu0 0.0
      %1640 = vmatpush1.msra.mxu0 %v1560
      %1641 = vmatprep.subr.mxu0 0.0
      %1642 = vmatpush1.msra.mxu0 %v1559
      %1643 = vmatprep.subr.mxu0 0.0
      %1644 = vmatpush1.msra.mxu0 %v1558
      %1645 = vmatprep.subr.mxu0 0.0
      %1646 = vmatpush1.msra.mxu0 %v1557
      %1647 = vmatprep.subr.mxu0 0.0
      %1648 = vmatpush1.msra.mxu0 %v1556
      %1649 = vmatprep.subr.mxu0 0.0
      %1650 = vmatpush2.msra.mxu0 0.0
      %1651 = vmatprep.subr.mxu0 0.0
      %1652 = vmatpush2.msra.mxu0 0.0
      %1653 = vmatprep.subr.mxu0 0.0
      %1654 = vmatpush2.msra.mxu0 0.0
      %1655 = vmatprep.subr.mxu0 0.0
      %1656 = vmatpush2.msra.mxu0 0.0
      %1657 = vmatprep.subr.mxu0 0.0
      %1658 = vmatpush2.msra.mxu0 0.0
      %1659 = vmatprep.subr.mxu0 0.0
      %1660 = vmatpush2.msra.mxu0 0.0
      %1661 = vmatprep.subr.mxu0 0.0
      %1662 = vmatpush2.msra.mxu0 0.0
      %1663 = vmatprep.subr.mxu0 0.0
      %1664 = vmatpush2.msra.mxu0 0.0
      %1665 = vmatprep.subr.mxu0 0.0
      %1666 = vmatpush2.msra.mxu0 0.0
      %1667 = vmatprep.subr.mxu0 0.0
      %1668 = vmatpush2.msra.mxu0 0.0
      %1669 = vmatprep.subr.mxu0 0.0
      %1670 = vmatpush2.msra.mxu0 0.0
      %1671 = vmatprep.subr.mxu0 0.0
      %1672 = vmatpush2.msra.mxu0 0.0
      %1673 = vmatprep.subr.mxu0 0.0
      %1674 = vmatpush2.msra.mxu0 0.0
      %1675 = vmatprep.subr.mxu0 0.0
      %1676 = vmatpush2.msra.mxu0 0.0
      %1677 = vmatprep.subr.mxu0 0.0
      %1678 = vmatpush2.msra.mxu0 0.0
      %1679 = vmatprep.subr.mxu0 0.0
      %1680 = vmatpush2.msra.mxu0 0.0
      %1681 = vmatprep.mubr.f32.mxu0 0.0
      %1682 = vmatmul.mubr.f32.gmra.mxu0 %v1570
      %v1683 = vpop.f32.mrf.mxu0
      %v1684 = vadd.f32 %v1568, %v1683
      %v1685 = vpop.f32.mrf.mxu0
      %1686 = vmatprep.mubr.f32.mxu0 0.0
      %1687 = vmatmul.mubr.f32.gmra.mxu0 %v1573
      %v1688 = vpop.f32.mrf.mxu0
      %v1689 = vadd.f32 %v1568, %v1688
      %v1690 = vpop.f32.mrf.mxu0
      %1691 = vmatprep.mubr.f32.mxu0 0.0
      %1692 = vmatmul.mubr.f32.gmra.mxu0 %v1576
      %v1693 = vpop.f32.mrf.mxu0
      %v1694 = vadd.f32 %v1568, %v1693
      %v1695 = vpop.f32.mrf.mxu0
      %1696 = vmatprep.mubr.f32.mxu0 0.0
      %1697 = vmatmul.mubr.f32.gmra.mxu0 %v1579
      %v1698 = vpop.f32.mrf.mxu0
      %v1699 = vadd.f32 %v1568, %v1698
      %v1700 = vpop.f32.mrf.mxu0
      %1701 = vmatprep.mubr.f32.mxu0 0.0
      %1702 = vmatmul.mubr.f32.gmra.mxu0 %v1582
      %v1703 = vpop.f32.mrf.mxu0
      %v1704 = vadd.f32 %v1568, %v1703
      %v1705 = vpop.f32.mrf.mxu0
      %1706 = vmatprep.mubr.f32.mxu0 0.0
      %1707 = vmatmul.mubr.f32.gmra.mxu0 %v1585
      %v1708 = vpop.f32.mrf.mxu0
      %v1709 = vadd.f32 %v1568, %v1708
      %v1710 = vpop.f32.mrf.mxu0
      %1711 = vmatprep.mubr.f32.mxu0 0.0
      %1712 = vmatmul.mubr.f32.gmra.mxu0 %v1588
      %v1713 = vpop.f32.mrf.mxu0
      %v1714 = vadd.f32 %v1568, %v1713
      %v1715 = vpop.f32.mrf.mxu0
      %1716 = vmatprep.mubr.f32.mxu0 0.0
      %1717 = vmatmul.mubr.f32.gmra.mxu0 %v1591
      %v1718 = vpop.f32.mrf.mxu0
      %v1719 = vadd.f32 %v1568, %v1718
      %v1720 = vpop.f32.mrf.mxu0
      %1721 = vmatprep.mubr.f32.mxu0 0.0
      %1722 = vmatmul.mubr.f32.gmra.mxu0 %v1594
      %v1723 = vpop.f32.mrf.mxu0
      %v1724 = vadd.f32 %v1568, %v1723
      %v1725 = vpop.f32.mrf.mxu0
      %1726 = vmatprep.mubr.f32.mxu0 0.0
      %1727 = vmatmul.mubr.f32.gmra.mxu0 %v1597
      %v1728 = vpop.f32.mrf.mxu0
      %v1729 = vadd.f32 %v1568, %v1728
      %v1730 = vpop.f32.mrf.mxu0
      %1731 = vmatprep.mubr.f32.mxu0 0.0
      %1732 = vmatmul.mubr.f32.gmra.mxu0 %v1600
      %v1733 = vpop.f32.mrf.mxu0
      %v1734 = vadd.f32 %v1568, %v1733
      %v1735 = vpop.f32.mrf.mxu0
      %1736 = vmatprep.mubr.f32.mxu0 0.0
      %1737 = vmatmul.mubr.f32.gmra.mxu0 %v1603
      %v1738 = vpop.f32.mrf.mxu0
      %v1739 = vadd.f32 %v1568, %v1738
      %v1740 = vpop.f32.mrf.mxu0
      %1741 = vmatprep.mubr.f32.mxu0 0.0
      %1742 = vmatmul.mubr.f32.gmra.mxu0 %v1606
      %v1743 = vpop.f32.mrf.mxu0
      %v1744 = vadd.f32 %v1568, %v1743
      %v1745 = vpop.f32.mrf.mxu0
      %1746 = vmatprep.mubr.f32.mxu0 0.0
      %1747 = vmatmul.mubr.f32.gmra.mxu0 %v1609
      %v1748 = vpop.f32.mrf.mxu0
      %v1749 = vadd.f32 %v1568, %v1748
      %v1750 = vpop.f32.mrf.mxu0
      %1751 = vmatprep.mubr.f32.mxu0 0.0
      %1752 = vmatmul.mubr.f32.gmra.mxu0 %v1612
      %v1753 = vpop.f32.mrf.mxu0
      %v1754 = vadd.f32 %v1568, %v1753
      %v1755 = vpop.f32.mrf.mxu0
      %1756 = vmatprep.mubr.f32.mxu0 0.0
      %1757 = vmatmul.mubr.f32.gmra.mxu0 %v1615
      %v1758 = vpop.f32.mrf.mxu0
      %v1759 = vadd.f32 %v1568, %v1758
      %v1760 = vpop.f32.mrf.mxu0
      %1761 = vdwg.mxu0
      %v1762 = vxor.u32 %v1684, 2147483648
      %v1763 = vxor.u32 %v1689, 2147483648
      %v1764 = vxor.u32 %v1694, 2147483648
      %v1765 = vxor.u32 %v1699, 2147483648
      %v1766 = vxor.u32 %v1704, 2147483648
      %v1767 = vxor.u32 %v1709, 2147483648
      %v1768 = vxor.u32 %v1714, 2147483648
      %v1769 = vxor.u32 %v1719, 2147483648
      %v1770 = vxor.u32 %v1724, 2147483648
      %v1771 = vxor.u32 %v1729, 2147483648
      %v1772 = vxor.u32 %v1734, 2147483648
      %v1773 = vxor.u32 %v1739, 2147483648
      %v1774 = vxor.u32 %v1744, 2147483648
      %v1775 = vxor.u32 %v1749, 2147483648
      %v1776 = vxor.u32 %v1754, 2147483648
      %v1777 = vxor.u32 %v1759, 2147483648
      %v1778 = vmul.f32 %v1762, 1.442695
      %v1779 = vpow.pop %v1778
      %v1780 = vmul.f32 %v1763, 1.442695
      %v1781 = vpow.pop %v1780
      %v1782 = vmul.f32 %v1764, 1.442695
      %v1783 = vpow.pop %v1782
      %v1784 = vmul.f32 %v1765, 1.442695
      %v1785 = vpow.pop %v1784
      %v1786 = vmul.f32 %v1766, 1.442695
      %v1787 = vpow.pop %v1786
      %v1788 = vmul.f32 %v1767, 1.442695
      %v1789 = vpow.pop %v1788
      %v1790 = vmul.f32 %v1768, 1.442695
      %v1791 = vpow.pop %v1790
      %v1792 = vmul.f32 %v1769, 1.442695
      %v1793 = vpow.pop %v1792
      %v1794 = vmul.f32 %v1770, 1.442695
      %v1795 = vpow.pop %v1794
      %v1796 = vmul.f32 %v1771, 1.442695
      %v1797 = vpow.pop %v1796
      %v1798 = vmul.f32 %v1772, 1.442695
      %v1799 = vpow.pop %v1798
      %v1800 = vmul.f32 %v1773, 1.442695
      %v1801 = vpow.pop %v1800
      %v1802 = vmul.f32 %v1774, 1.442695
      %v1803 = vpow.pop %v1802
      %v1804 = vmul.f32 %v1775, 1.442695
      %v1805 = vpow.pop %v1804
      %v1806 = vmul.f32 %v1776, 1.442695
      %v1807 = vpow.pop %v1806
      %v1808 = vmul.f32 %v1777, 1.442695
      %v1809 = vpow.pop %v1808
      %v1810 = vadd.f32 %v1779, 1.0
      %v1811 = vadd.f32 %v1781, 1.0
      %v1812 = vadd.f32 %v1783, 1.0
      %v1813 = vadd.f32 %v1785, 1.0
      %v1814 = vadd.f32 %v1787, 1.0
      %v1815 = vadd.f32 %v1789, 1.0
      %v1816 = vadd.f32 %v1791, 1.0
      %v1817 = vadd.f32 %v1793, 1.0
      %v1818 = vadd.f32 %v1795, 1.0
      %v1819 = vadd.f32 %v1797, 1.0
      %v1820 = vadd.f32 %v1799, 1.0
      %v1821 = vadd.f32 %v1801, 1.0
      %v1822 = vadd.f32 %v1803, 1.0
      %v1823 = vadd.f32 %v1805, 1.0
      %v1824 = vadd.f32 %v1807, 1.0
      %v1825 = vadd.f32 %v1809, 1.0
      %v1826 = vrcp.pop %v1810
      %v1827 = vmul.f32 1.0, %v1826
      %v1828 = vrcp.pop %v1811
      %v1829 = vmul.f32 1.0, %v1828
      %v1830 = vrcp.pop %v1812
      %v1831 = vmul.f32 1.0, %v1830
      %v1832 = vrcp.pop %v1813
      %v1833 = vmul.f32 1.0, %v1832
      %v1834 = vrcp.pop %v1814
      %v1835 = vmul.f32 1.0, %v1834
      %v1836 = vrcp.pop %v1815
      %v1837 = vmul.f32 1.0, %v1836
      %v1838 = vrcp.pop %v1816
      %v1839 = vmul.f32 1.0, %v1838
      %v1840 = vrcp.pop %v1817
      %v1841 = vmul.f32 1.0, %v1840
      %v1842 = vrcp.pop %v1818
      %v1843 = vmul.f32 1.0, %v1842
      %v1844 = vrcp.pop %v1819
      %v1845 = vmul.f32 1.0, %v1844
      %v1846 = vrcp.pop %v1820
      %v1847 = vmul.f32 1.0, %v1846
      %v1848 = vrcp.pop %v1821
      %v1849 = vmul.f32 1.0, %v1848
      %v1850 = vrcp.pop %v1822
      %v1851 = vmul.f32 1.0, %v1850
      %v1852 = vrcp.pop %v1823
      %v1853 = vmul.f32 1.0, %v1852
      %v1854 = vrcp.pop %v1824
      %v1855 = vmul.f32 1.0, %v1854
      %v1856 = vrcp.pop %v1825
      %v1857 = vmul.f32 1.0, %v1856
      %1858 = vst [vmem:[%s172] sm:$0xff] %v1827
      %1859 = vst [vmem:[%s172 + $0x8] sm:$0xff] %v1829
      %1860 = vst [vmem:[%s172 + $0x10] sm:$0xff] %v1831
      %1861 = vst [vmem:[%s172 + $0x18] sm:$0xff] %v1833
      %1862 = vst [vmem:[%s172 + $0x20] sm:$0xff] %v1835
      %1863 = vst [vmem:[%s172 + $0x28] sm:$0xff] %v1837
      %1864 = vst [vmem:[%s172 + $0x30] sm:$0xff] %v1839
      %1865 = vst [vmem:[%s172 + $0x38] sm:$0xff] %v1841
      %1866 = vst [vmem:[%s172 + $0x40] sm:$0xff] %v1843
      %1867 = vst [vmem:[%s172 + $0x48] sm:$0xff] %v1845
      %1868 = vst [vmem:[%s172 + $0x50] sm:$0xff] %v1847
      %1869 = vst [vmem:[%s172 + $0x58] sm:$0xff] %v1849
      %1870 = vst [vmem:[%s172 + $0x60] sm:$0xff] %v1851
      %1871 = vst [vmem:[%s172 + $0x68] sm:$0xff] %v1853
      %1872 = vst [vmem:[%s172 + $0x70] sm:$0xff] %v1855
      %1873 = vst [vmem:[%s172 + $0x78] sm:$0xff] %v1857
      %s1874 = smul.u32 16, %s14
      %p1875 = scmp.lt.s32.totalorder %s1874, 31
      %s1876 = scalar_select %p1875, %s1874, 31
      %s1877 = smul.addr %s1876, 8
      %s1878 = scalar_lea.vmem %s3, %s1877
      // Predicated region
      $region33: #{network_forward.1} parent=31 // pred_check
        %p1879 = pneg %p100
      $region34: #{network_forward.1} parent=31 // pred_check_branch
        %1881 = sbr.rel (%p1879) target = $region36
      $region35: #{network_forward.1} parent=31 // pred_region
        %s1882 = smul.u32 16, %s14
      $region36: #{network_forward.1} parent=31 // pred_fallthru
        _
    $region32: #{network_forward.1} parent=5 // pred_fallthru
      _
    %p1883 = scmp.le.s32.totalorder 2, %s9
    // Predicated region
    $region37: #{network_forward.1} parent=5 // pred_check
      %p1884 = pneg %p1883
    $region38: #{network_forward.1} parent=5 // pred_check_branch
      %1886 = sbr.rel (%p1884) target = $region40
    $region39: #{network_forward.1} parent=5 // pred_region
      %s1887 = ssub.s32 %s9, 2
      // Predicated region
      $region41: #{network_forward.1} parent=39 // pred_check
        %p1888 = pneg %p106
      $region42: #{network_forward.1} parent=39 // pred_check_branch
        %1890 = sbr.rel (%p1888) target = $region44
      $region43: #{network_forward.1} parent=39 // pred_region
        %s1891 = smul.u32 16, %s15
        %p1892 = scmp.lt.s32.totalorder %s1891, 31
        %s1893 = scalar_select %p1892, %s1891, 31
        %s1894 = smul.addr %s1893, 8
        %s1895 = scalar_lea.vmem %s3, %s1894
      $region44: #{network_forward.1} parent=39 // pred_fallthru
        _
    $region40: #{network_forward.1} parent=5 // pred_fallthru
      _
  $region6: #{network_forward.1} parent=0 // loop_footer
    %s13 = sadd.s32 1, %s9
  $region7: #{network_forward.1} parent=0 // loop_footer_branch
    %8 = sbr.rel target = $region3
  $region8: #{network_forward.1} parent=0 // loop_exit
    _

</llo_original>
